<compile_context>
chip_gen: v5e
topology: v5e:2x2
jax: 0.10.0
libtpu: 0.0.40
codegen_flags: <defaults>
</compile_context>

<pallas_src>
import functools
import math

import jax
import jax.numpy as jnp
from jax.experimental import pallas as pl
from jax.experimental.pallas import tpu as pltpu


def _softplus(x):
    # overflow-safe softplus; matches F.softplus (threshold=20)
    return jnp.where(x > 20.0, x, jnp.log(1.0 + jnp.exp(jnp.minimum(x, 20.0))))


# ---------------------------------------------------------------------------
# Kernel 1: reparameterized sampling + per-tile KL partial sums
# ---------------------------------------------------------------------------
_KL_ROWS = 8
_KL_COLS = 512          # lane-dense: 4 * 128
_KL_TILE = _KL_ROWS * _KL_COLS


def _sample_kl_kernel(mu_ref, rho_ref, eps_ref, pmu_ref, psig_ref,
                      w_ref, kl_ref, *, n):
    i = pl.program_id(0)
    mu = mu_ref[...]
    sigma = _softplus(rho_ref[...])
    w_ref[...] = mu + sigma * eps_ref[...]

    psig = psig_ref[...]
    kl = (jnp.log(psig + 1e-15) - jnp.log(sigma + 1e-15)
          + (sigma * sigma + (mu - pmu_ref[...]) ** 2) / (2.0 * psig * psig)
          - 0.5)
    # zero out the padded tail of the last tile
    r = jax.lax.broadcasted_iota(jnp.int32, (_KL_ROWS, _KL_COLS), 0)
    c = jax.lax.broadcasted_iota(jnp.int32, (_KL_ROWS, _KL_COLS), 1)
    gidx = (i * _KL_ROWS + r) * _KL_COLS + c
    kl = jnp.where(gidx < n, kl, 0.0)
    kl_ref[...] = jnp.broadcast_to(jnp.sum(kl), (1, 128))


def sample_and_kl(mu, rho, eps, prior_mu, prior_sigma):
    """Returns (sampled param with mu.shape, scalar KL)."""
    orig_shape = mu.shape
    n = int(mu.size)
    n_tiles = max(1, -(-n // _KL_TILE))
    n_pad = n_tiles * _KL_TILE

    def prep(a, pad_value):
        a = a.reshape(-1).astype(jnp.float32)
        a = jnp.pad(a, (0, n_pad - n), constant_values=pad_value)
        return a.reshape(n_tiles * _KL_ROWS, _KL_COLS)

    args = [prep(a, 0.0) for a in (mu, rho, eps, prior_mu)] + [prep(prior_sigma, 1.0)]

    tile_spec = pl.BlockSpec((_KL_ROWS, _KL_COLS), lambda i: (i, 0))
    w2, klp = pl.pallas_call(
        functools.partial(_sample_kl_kernel, n=n),
        grid=(n_tiles,),
        in_specs=[tile_spec] * 5,
        out_specs=[tile_spec, pl.BlockSpec((1, 128), lambda i: (0, i))],
        out_shape=[jax.ShapeDtypeStruct((n_tiles * _KL_ROWS, _KL_COLS), jnp.float32),
                   jax.ShapeDtypeStruct((1, n_tiles * 128), jnp.float32)],
        compiler_params=pltpu.CompilerParams(dimension_semantics=("parallel",)),
        cost_estimate=pl.CostEstimate(flops=14 * n_pad, transcendentals=4 * n_pad,
                                      bytes_accessed=4 * (6 * n_pad + n_tiles * 128)),
    )(*args)

    w = w2.reshape(-1)[:n].reshape(orig_shape)
    kl = jnp.sum(klp.reshape(n_tiles, 128)[:, 0])
    return w, kl


# ---------------------------------------------------------------------------
# Kernel 2: transposed conv via sub-pixel (phase) decomposition.
#   output element o = s*t + r  gets taps {k : (r + p - k*d) % s == 0},
#   each reading input element  t + (r + p - k*d)//s   -> dense stride-1 conv
#   over the original input, one folded MXU contraction per phase.
# ---------------------------------------------------------------------------
def _conv_phase_kernel(x_ref, w_ref, b_ref, o_ref, *, tb, tw, offs_h, offs_w):
    # x_ref: (1, Hp, Wp, Cin)    w_ref: (s*s, Cout, Kc*Kc*Cin)
    # b_ref: (Cout, 1)           o_ref: (1, s, s, Cout, tb*tw)
    cin = x_ref.shape[3]
    t0 = pl.program_id(1) * tb
    bias = b_ref[...]                                        # (Cout, 1) f32
    s_w = len(offs_w)
    for rh, row_offs in enumerate(offs_h):                   # static phase loops
        for rw, col_offs in enumerate(offs_w):
            pieces = []
            for dh in row_offs:                              # static tap loops
                for dw in col_offs:
                    patch = x_ref[0, pl.ds(t0 + dh, tb), dw:dw + tw, :]  # (tb,tw,Cin)
                    pieces.append(patch.reshape(tb * tw, cin))
            p = pieces[0] if len(pieces) == 1 else jnp.concatenate(pieces, axis=1)
            acc = jax.lax.dot_general(                       # (Cout, tb*tw), f32 acc
                w_ref[rh * s_w + rw], p,
                dimension_numbers=(((1,), (1,)), ((), ())),
                preferred_element_type=jnp.float32)
            o_ref[0, rh, rw, :, :] = (acc + bias).astype(o_ref.dtype)


def conv_transpose2d_pallas(x_nchw, weight, bias, stride, padding,
                            output_padding, dilation=1, groups=1,
                            matmul_dtype=jnp.bfloat16):
    """weight: (Cin, Cout, K, K) -- PyTorch conv_transpose2d convention."""
    if groups != 1:
        # TODO(synk): grouped transposed convolution
        raise NotImplementedError("groups > 1 not supported")
    N, Cin, H, W = x_nchw.shape
    Cin_w, Cout, K, _ = weight.shape
    assert Cin == Cin_w
    s, p, d, op = int(stride), int(padding), int(dilation), int(output_padding)

    OH = (H - 1) * s - 2 * p + d * (K - 1) + op + 1
    OW = (W - 1) * s - 2 * p + d * (K - 1) + op + 1
    assert OH > 0 and OW > 0, "empty output"

    # ---- phase decomposition bookkeeping (all static Python) ---------------
    taps = [[k for k in range(K) if (r + p - k * d) % s == 0] for r in range(s)]
    Kc = max(1, max(len(t) for t in taps))
    T_h = -(-OH // s)                       # output rows per phase (ceil)
    T_w = -(-OW // s)                       # output cols per phase (ceil)

    # output-row block size: keep tb*T_w a multiple of 128 (lane-dense stores)
    m = 128 // math.gcd(T_w, 128)
    if m >= T_h:
        tb = T_h
    else:
        tb = m
        while tb * 2 * T_w <= 1024 and tb * 2 < T_h:
            tb *= 2
    n_tb = -(-T_h // tb)
    T_h_pad = n_tb * tb

    raw_offs = [[(r + p - k * d) // s for k in taps[r]] for r in range(s)]
    flat = [o for lst in raw_offs for o in lst] + [0]
    off_min, off_max = min(flat), max(flat)

    pad_top = max(0, -off_min)
    pad_lft = max(0, -off_min)
    pad_bot = max(0, (T_h_pad - 1) + off_max - (H - 1))
    pad_rgt = max(0, (T_w - 1) + off_max - (W - 1))

    def shifted(shift):
        out = []
        for r in range(s):
            lst = [o + shift for o in raw_offs[r]]
            lst += [shift] * (Kc - len(lst))        # dummy taps (weight == 0)
            out.append(tuple(lst))
        return tuple(out)

    offs_h, offs_w = shifted(pad_top), shifted(pad_lft)

    # ---- operands ----------------------------------------------------------
    x_nhwc = jnp.transpose(x_nchw, (0, 2, 3, 1)).astype(matmul_dtype)
    xp = jnp.pad(x_nhwc, ((0, 0), (pad_top, pad_bot), (pad_lft, pad_rgt), (0, 0)))
    Hp, Wp = xp.shape[1], xp.shape[2]

    # per-phase weight matrices, contraction layout index = tap*Cin + ci
    wt = jnp.transpose(weight.astype(jnp.float32), (1, 0, 2, 3))   # (Cout,Cin,K,K)
    zero = jnp.zeros((Cout, Cin), jnp.float32)
    mats = []
    for rh in range(s):
        for rw in range(s):
            cols = []
            for jh in range(Kc):
                for jw in range(Kc):
                    if jh < len(taps[rh]) and jw < len(taps[rw]):
                        cols.append(wt[:, :, taps[rh][jh], taps[rw][jw]])
                    else:
                        cols.append(zero)
            mats.append(jnp.concatenate(cols, axis=1))             # (Cout, Kc*Kc*Cin)
    w_phases = jnp.stack(mats, axis=0).astype(matmul_dtype)        # (s*s, Cout, Kc*Kc*Cin)

    b = (jnp.zeros((Cout,), jnp.float32) if bias is None
         else bias.astype(jnp.float32)).reshape(Cout, 1)

    # ---- pallas call -------------------------------------------------------
    kernel = functools.partial(_conv_phase_kernel, tb=tb, tw=T_w,
                               offs_h=offs_h, offs_w=offs_w)
    itemsize = jnp.dtype(matmul_dtype).itemsize
    flops = 2 * N * (s * s) * Cout * (Kc * Kc * Cin) * (T_h_pad * T_w)
    bytes_accessed = (N * Hp * Wp * Cin * itemsize
                      + s * s * Cout * Kc * Kc * Cin * itemsize
                      + Cout * 4
                      + N * s * s * Cout * T_h_pad * T_w * 4)

    out5 = pl.pallas_call(
        kernel,
        grid=(N, n_tb),
        in_specs=[
            pl.BlockSpec((1, Hp, Wp, Cin), lambda n, t: (n, 0, 0, 0)),
            pl.BlockSpec((s * s, Cout, Kc * Kc * Cin), lambda n, t: (0, 0, 0)),
            pl.BlockSpec((Cout, 1), lambda n, t: (0, 0)),
        ],
        out_specs=pl.BlockSpec((1, s, s, Cout, tb * T_w),
                               lambda n, t: (n, 0, 0, 0, t)),
        out_shape=jax.ShapeDtypeStruct((N, s, s, Cout, T_h_pad * T_w), jnp.float32),
        compiler_params=pltpu.CompilerParams(
            dimension_semantics=("parallel", "parallel")),
        cost_estimate=pl.CostEstimate(flops=int(flops), transcendentals=0,
                                      bytes_accessed=int(bytes_accessed)),
    )(xp, w_phases, b)

    # pixel-shuffle phases back into NCHW
    out = out5.reshape(N, s, s, Cout, T_h_pad, T_w)
    out = jnp.transpose(out, (0, 3, 4, 1, 5, 2))       # (N, Cout, T_h_pad, s, T_w, s)
    out = out.reshape(N, Cout, T_h_pad * s, T_w * s)
    return out[:, :, :OH, :OW]


# ---------------------------------------------------------------------------
# Module-equivalent wrapper
# ---------------------------------------------------------------------------
class ConvTranspose2dVariational:
    def __init__(self, prior_mean, prior_variance, posterior_mu_init,
                 posterior_rho_init, in_channels, out_channels, kernel_size,
                 stride=1, padding=0, output_padding=0, dilation=1, groups=1,
                 bias=True, *, key, matmul_dtype=jnp.bfloat16):
        if in_channels % groups != 0 or out_channels % groups != 0:
            raise ValueError("invalid channel/group configuration")
        if groups != 1:
            # TODO(synk): grouped transposed convolution
            raise NotImplementedError("groups > 1 not supported")
        self.in_channels, self.out_channels = in_channels, out_channels
        self.kernel_size = kernel_size
        self.stride, self.padding = stride, padding
        self.output_padding, self.dilation, self.groups = output_padding, dilation, groups
        self.posterior_mu_init = (posterior_mu_init,)
        self.posterior_rho_init = (posterior_rho_init,)
        self.bias = bias
        self.matmul_dtype = matmul_dtype

        kshape = (in_channels, out_channels // groups, kernel_size, kernel_size)
        k1, k2, k3, k4 = jax.random.split(key, 4)
        # mirrors init_parameters(): mu ~ N(0, 0.1), rho ~ N(rho_init, 0.1)
        self.mu_kernel = 0.1 * jax.random.normal(k1, kshape, jnp.float32)
        self.rho_kernel = posterior_rho_init + 0.1 * jax.random.normal(k2, kshape, jnp.float32)
        self.prior_weight_mu = jnp.full(kshape, prior_mean, jnp.float32)
        self.prior_weight_sigma = jnp.full(kshape, prior_variance, jnp.float32)
        if bias:
            self.mu_bias = 0.1 * jax.random.normal(k3, (out_channels,), jnp.float32)
            self.rho_bias = posterior_rho_init + 0.1 * jax.random.normal(k4, (out_channels,), jnp.float32)
            self.prior_bias_mu = jnp.full((out_channels,), prior_mean, jnp.float32)
            self.prior_bias_sigma = jnp.full((out_channels,), prior_variance, jnp.float32)

    def forward(self, x, key):
        k_w, k_b = jax.random.split(key)
        eps_kernel = jax.random.normal(k_w, self.mu_kernel.shape, jnp.float32)
        weight, kl_weight = sample_and_kl(self.mu_kernel, self.rho_kernel, eps_kernel,
                                          self.prior_weight_mu, self.prior_weight_sigma)
        bias_s, kl = None, kl_weight
        if self.bias:
            eps_bias = jax.random.normal(k_b, self.mu_bias.shape, jnp.float32)
            bias_s, kl_bias = sample_and_kl(self.mu_bias, self.rho_bias, eps_bias,
                                            self.prior_bias_mu, self.prior_bias_sigma)
            kl = kl_weight + kl_bias
        out = conv_transpose2d_pallas(x, weight, bias_s, self.stride, self.padding,
                                      self.output_padding, self.dilation, self.groups,
                                      matmul_dtype=self.matmul_dtype)
        return out, kl


# ---------------------------------------------------------------------------
# Pure-JAX reference (silent correctness checks)
# ---------------------------------------------------------------------------
def _ref_conv_transpose(x, w, b, stride, padding, output_padding, dilation, dtype):
    K = w.shape[-1]
    w_conv = jnp.transpose(w, (1, 0, 2, 3))[:, :, ::-1, ::-1]        # (Cout, Cin, K, K)
    plo = dilation * (K - 1) - padding
    phi = plo + output_padding
    out = jax.lax.conv_general_dilated(
        x.astype(dtype).astype(jnp.float32),
        w_conv.astype(dtype).astype(jnp.float32),
        window_strides=(1, 1), padding=[(plo, phi), (plo, phi)],
        lhs_dilation=(stride, stride), rhs_dilation=(dilation, dilation),
        dimension_numbers=('NCHW', 'OIHW', 'NCHW'),
        precision=jax.lax.Precision.HIGHEST)
    if b is not None:
        out = out + b[None, :, None, None]
    return out


def _ref_forward(layer, x, key):
    k_w, k_b = jax.random.split(key)
    eps_w = jax.random.normal(k_w, layer.mu_kernel.shape, jnp.float32)
    sig_w = _softplus(layer.rho_kernel)
    w = layer.mu_kernel + sig_w * eps_w

    def kl_div(mu_q, sig_q, mu_p, sig_p):
        return jnp.sum(jnp.log(sig_p + 1e-15) - jnp.log(sig_q + 1e-15)
                       + (sig_q ** 2 + (mu_q - mu_p) ** 2) / (2 * sig_p ** 2) - 0.5)

    kl = kl_div(layer.mu_kernel, sig_w, layer.prior_weight_mu, layer.prior_weight_sigma)
    eps_b = jax.random.normal(k_b, layer.mu_bias.shape, jnp.float32)
    sig_b = _softplus(layer.rho_bias)
    b = layer.mu_bias + sig_b * eps_b
    kl = kl + kl_div(layer.mu_bias, sig_b, layer.prior_bias_mu, layer.prior_bias_sigma)

    out = _ref_conv_transpose(x, w, b, layer.stride, layer.padding,
                              layer.output_padding, layer.dilation, layer.matmul_dtype)
    return out, kl


if __name__ == "__main__":
    key = jax.random.PRNGKey(0)
    k_param, k_data, k_fwd = jax.random.split(key, 3)

    layer = ConvTranspose2dVariational(
        prior_mean=0.0, prior_variance=1.0,
        posterior_mu_init=0.0, posterior_rho_init=-3.0,
        in_channels=4, out_channels=8, kernel_size=3,
        stride=2, padding=1, output_padding=1, dilation=1, groups=1, bias=True,
        key=k_param)

    x = jax.random.normal(k_data, (2, 4, 16, 16), jnp.float32)   # NCHW

    # 1) deterministic transposed-conv check (identical weights on both sides)
    conv_p = conv_transpose2d_pallas(x, layer.mu_kernel, layer.mu_bias,
                                     stride=2, padding=1, output_padding=1,
                                     dilation=1, groups=1)
    conv_p = jax.block_until_ready(conv_p)
    conv_r = _ref_conv_transpose(x, layer.mu_kernel, layer.mu_bias,
                                 2, 1, 1, 1, jnp.bfloat16)
    assert conv_p.shape == (2, 8, 32, 32), conv_p.shape
    assert jnp.allclose(conv_p, conv_r, atol=1e-3, rtol=1e-3), \
        float(jnp.max(jnp.abs(conv_p - conv_r)))

    # 2) full variational forward (sampling + KL + transposed conv)
    out, kl = layer.forward(x, k_fwd)
    out = jax.block_until_ready(out)
    kl = jax.block_until_ready(kl)

    ref_out, ref_kl = _ref_forward(layer, x, k_fwd)
    assert out.shape == (2, 8, 32, 32), out.shape
    assert jnp.allclose(out, ref_out, atol=1e-2, rtol=1e-2), \
        float(jnp.max(jnp.abs(out - ref_out)))
    assert jnp.allclose(kl, ref_kl, rtol=1e-4, atol=1e-2), (float(kl), float(ref_kl))

    print("KERNEL_OK")
</pallas_src>

<mosaic_0001>
module attributes {stable_mosaic.version = 11 : i64} {
  func.func @_conv_phase_kernel(%arg0: i32, %arg1: i32, %arg2: memref<1x17x17x4xbf16, #tpu.memory_space<vmem>>, %arg3: memref<4x8x16xbf16, #tpu.memory_space<vmem>>, %arg4: memref<8x1xf32, #tpu.memory_space<vmem>>, %arg5: memref<1x2x2x8x128xf32, #tpu.memory_space<vmem>>) attributes {dimension_semantics = [#tpu.dimension_semantics<parallel>, #tpu.dimension_semantics<parallel>], iteration_bounds = array<i64: 2, 2>, scalar_prefetch = 0 : i64, scratch_operands = 0 : i64, tpu.core_type = #tpu.core_type<tc>, window_params = [{transform_indices = @transform_0, window_bounds = array<i64: 1, 17, 17, 4>}, {pipeline_mode = #tpu.pipeline_mode<synchronous>, transform_indices = @transform_1, window_bounds = array<i64: 4, 8, 16>}, {pipeline_mode = #tpu.pipeline_mode<synchronous>, transform_indices = @transform_2, window_bounds = array<i64: 8, 1>}, {transform_indices = @transform_3, window_bounds = array<i64: 1, 2, 2, 8, 128>}]} {
    %c8_i32 = arith.constant 8 : i32
    %0 = arith.muli %arg1, %c8_i32 : i32
    %c0 = arith.constant 0 : index
    %c0_0 = arith.constant 0 : index
    %1 = vector.load %arg4[%c0, %c0_0] : memref<8x1xf32, #tpu.memory_space<vmem>>, vector<8x1xf32>
    %c0_i32 = arith.constant 0 : i32
    %2 = arith.addi %0, %c0_i32 : i32
    %c0_1 = arith.constant 0 : index
    %3 = arith.index_cast %2 : i32 to index
    %c0_2 = arith.constant 0 : index
    %c0_3 = arith.constant 0 : index
    %4 = vector.load %arg2[%c0_1, %3, %c0_2, %c0_3] : memref<1x17x17x4xbf16, #tpu.memory_space<vmem>>, vector<1x8x16x4xbf16>
    %5 = vector.shape_cast %4 : vector<1x8x16x4xbf16> to vector<8x16x4xbf16>
    %6 = vector.shape_cast %5 : vector<8x16x4xbf16> to vector<128x4xbf16>
    %c0_i32_4 = arith.constant 0 : i32
    %7 = arith.addi %0, %c0_i32_4 : i32
    %c0_5 = arith.constant 0 : index
    %8 = arith.index_cast %7 : i32 to index
    %c0_6 = arith.constant 0 : index
    %c0_7 = arith.constant 0 : index
    %9 = vector.load %arg2[%c0_5, %8, %c0_6, %c0_7] : memref<1x17x17x4xbf16, #tpu.memory_space<vmem>>, vector<1x8x16x4xbf16>
    %10 = vector.shape_cast %9 : vector<1x8x16x4xbf16> to vector<8x16x4xbf16>
    %11 = vector.shape_cast %10 : vector<8x16x4xbf16> to vector<128x4xbf16>
    %c0_i32_8 = arith.constant 0 : i32
    %12 = arith.addi %0, %c0_i32_8 : i32
    %c0_9 = arith.constant 0 : index
    %13 = arith.index_cast %12 : i32 to index
    %c0_10 = arith.constant 0 : index
    %c0_11 = arith.constant 0 : index
    %14 = vector.load %arg2[%c0_9, %13, %c0_10, %c0_11] : memref<1x17x17x4xbf16, #tpu.memory_space<vmem>>, vector<1x8x16x4xbf16>
    %15 = vector.shape_cast %14 : vector<1x8x16x4xbf16> to vector<8x16x4xbf16>
    %16 = vector.shape_cast %15 : vector<8x16x4xbf16> to vector<128x4xbf16>
    %c0_i32_12 = arith.constant 0 : i32
    %17 = arith.addi %0, %c0_i32_12 : i32
    %c0_13 = arith.constant 0 : index
    %18 = arith.index_cast %17 : i32 to index
    %c0_14 = arith.constant 0 : index
    %c0_15 = arith.constant 0 : index
    %19 = vector.load %arg2[%c0_13, %18, %c0_14, %c0_15] : memref<1x17x17x4xbf16, #tpu.memory_space<vmem>>, vector<1x8x16x4xbf16>
    %20 = vector.shape_cast %19 : vector<1x8x16x4xbf16> to vector<8x16x4xbf16>
    %21 = vector.shape_cast %20 : vector<8x16x4xbf16> to vector<128x4xbf16>
    %22 = tpu.concatenate %6, %11, %16, %21 in 1 : vector<128x4xbf16>, vector<128x4xbf16>, vector<128x4xbf16>, vector<128x4xbf16> -> vector<128x16xbf16>
    %c0_16 = arith.constant 0 : index
    %c0_17 = arith.constant 0 : index
    %c0_18 = arith.constant 0 : index
    %23 = vector.load %arg3[%c0_16, %c0_17, %c0_18] : memref<4x8x16xbf16, #tpu.memory_space<vmem>>, vector<1x8x16xbf16>
    %24 = vector.shape_cast %23 : vector<1x8x16xbf16> to vector<8x16xbf16>
    %cst = arith.constant dense<0.000000e+00> : vector<8x128xf32>
    %25 = tpu.matmul %24, %22, %cst {dimension_numbers = #tpu.dot_dimension_numbers<[1], [1], [0], [0], [0, 0, 1, 0], [], []>} : vector<8x16xbf16>, vector<128x16xbf16>, vector<8x128xf32> -> vector<8x128xf32>
    %26 = vector.broadcast %1 : vector<8x1xf32> to vector<8x128xf32>
    %27 = arith.addf %25, %26 : vector<8x128xf32>
    %c0_19 = arith.constant 0 : index
    %c0_20 = arith.constant 0 : index
    %c0_21 = arith.constant 0 : index
    %c0_22 = arith.constant 0 : index
    %c0_23 = arith.constant 0 : index
    %28 = vector.load %arg5[%c0_19, %c0_20, %c0_21, %c0_22, %c0_23] : memref<1x2x2x8x128xf32, #tpu.memory_space<vmem>>, vector<1x1x1x8x128xf32>
    %29 = vector.shape_cast %28 : vector<1x1x1x8x128xf32> to vector<8x128xf32>
    %30 = vector.shape_cast %27 : vector<8x128xf32> to vector<1x1x1x8x128xf32>
    tpu.vector_store %arg5[%c0_19, %c0_20, %c0_21, %c0_22, %c0_23], %30 {strides = array<i32>} : memref<1x2x2x8x128xf32, #tpu.memory_space<vmem>>, vector<1x1x1x8x128xf32>,
    %c0_i32_24 = arith.constant 0 : i32
    %31 = arith.addi %0, %c0_i32_24 : i32
    %c0_25 = arith.constant 0 : index
    %32 = arith.index_cast %31 : i32 to index
    %c1 = arith.constant 1 : index
    %c0_26 = arith.constant 0 : index
    %33 = vector.load %arg2[%c0_25, %32, %c1, %c0_26] : memref<1x17x17x4xbf16, #tpu.memory_space<vmem>>, vector<1x8x16x4xbf16>
    %34 = vector.shape_cast %33 : vector<1x8x16x4xbf16> to vector<8x16x4xbf16>
    %35 = vector.shape_cast %34 : vector<8x16x4xbf16> to vector<128x4xbf16>
    %c0_i32_27 = arith.constant 0 : i32
    %36 = arith.addi %0, %c0_i32_27 : i32
    %c0_28 = arith.constant 0 : index
    %37 = arith.index_cast %36 : i32 to index
    %c0_29 = arith.constant 0 : index
    %c0_30 = arith.constant 0 : index
    %38 = vector.load %arg2[%c0_28, %37, %c0_29, %c0_30] : memref<1x17x17x4xbf16, #tpu.memory_space<vmem>>, vector<1x8x16x4xbf16>
    %39 = vector.shape_cast %38 : vector<1x8x16x4xbf16> to vector<8x16x4xbf16>
    %40 = vector.shape_cast %39 : vector<8x16x4xbf16> to vector<128x4xbf16>
    %c0_i32_31 = arith.constant 0 : i32
    %41 = arith.addi %0, %c0_i32_31 : i32
    %c0_32 = arith.constant 0 : index
    %42 = arith.index_cast %41 : i32 to index
    %c1_33 = arith.constant 1 : index
    %c0_34 = arith.constant 0 : index
    %43 = vector.load %arg2[%c0_32, %42, %c1_33, %c0_34] : memref<1x17x17x4xbf16, #tpu.memory_space<vmem>>, vector<1x8x16x4xbf16>
    %44 = vector.shape_cast %43 : vector<1x8x16x4xbf16> to vector<8x16x4xbf16>
    %45 = vector.shape_cast %44 : vector<8x16x4xbf16> to vector<128x4xbf16>
    %c0_i32_35 = arith.constant 0 : i32
    %46 = arith.addi %0, %c0_i32_35 : i32
    %c0_36 = arith.constant 0 : index
    %47 = arith.index_cast %46 : i32 to index
    %c0_37 = arith.constant 0 : index
    %c0_38 = arith.constant 0 : index
    %48 = vector.load %arg2[%c0_36, %47, %c0_37, %c0_38] : memref<1x17x17x4xbf16, #tpu.memory_space<vmem>>, vector<1x8x16x4xbf16>
    %49 = vector.shape_cast %48 : vector<1x8x16x4xbf16> to vector<8x16x4xbf16>
    %50 = vector.shape_cast %49 : vector<8x16x4xbf16> to vector<128x4xbf16>
    %51 = tpu.concatenate %35, %40, %45, %50 in 1 : vector<128x4xbf16>, vector<128x4xbf16>, vector<128x4xbf16>, vector<128x4xbf16> -> vector<128x16xbf16>
    %c1_39 = arith.constant 1 : index
    %c0_40 = arith.constant 0 : index
    %c0_41 = arith.constant 0 : index
    %52 = vector.load %arg3[%c1_39, %c0_40, %c0_41] : memref<4x8x16xbf16, #tpu.memory_space<vmem>>, vector<1x8x16xbf16>
    %53 = vector.shape_cast %52 : vector<1x8x16xbf16> to vector<8x16xbf16>
    %cst_42 = arith.constant dense<0.000000e+00> : vector<8x128xf32>
    %54 = tpu.matmul %53, %51, %cst_42 {dimension_numbers = #tpu.dot_dimension_numbers<[1], [1], [0], [0], [0, 0, 1, 0], [], []>} : vector<8x16xbf16>, vector<128x16xbf16>, vector<8x128xf32> -> vector<8x128xf32>
    %55 = vector.broadcast %1 : vector<8x1xf32> to vector<8x128xf32>
    %56 = arith.addf %54, %55 : vector<8x128xf32>
    %c0_43 = arith.constant 0 : index
    %c0_44 = arith.constant 0 : index
    %c1_45 = arith.constant 1 : index
    %c0_46 = arith.constant 0 : index
    %c0_47 = arith.constant 0 : index
    %57 = vector.load %arg5[%c0_43, %c0_44, %c1_45, %c0_46, %c0_47] : memref<1x2x2x8x128xf32, #tpu.memory_space<vmem>>, vector<1x1x1x8x128xf32>
    %58 = vector.shape_cast %57 : vector<1x1x1x8x128xf32> to vector<8x128xf32>
    %59 = vector.shape_cast %56 : vector<8x128xf32> to vector<1x1x1x8x128xf32>
    tpu.vector_store %arg5[%c0_43, %c0_44, %c1_45, %c0_46, %c0_47], %59 {strides = array<i32>} : memref<1x2x2x8x128xf32, #tpu.memory_space<vmem>>, vector<1x1x1x8x128xf32>,
    %c1_i32 = arith.constant 1 : i32
    %60 = arith.addi %0, %c1_i32 : i32
    %c0_48 = arith.constant 0 : index
    %61 = arith.index_cast %60 : i32 to index
    %c0_49 = arith.constant 0 : index
    %c0_50 = arith.constant 0 : index
    %62 = vector.load %arg2[%c0_48, %61, %c0_49, %c0_50] : memref<1x17x17x4xbf16, #tpu.memory_space<vmem>>, vector<1x8x16x4xbf16>
    %63 = vector.shape_cast %62 : vector<1x8x16x4xbf16> to vector<8x16x4xbf16>
    %64 = vector.shape_cast %63 : vector<8x16x4xbf16> to vector<128x4xbf16>
    %c1_i32_51 = arith.constant 1 : i32
    %65 = arith.addi %0, %c1_i32_51 : i32
    %c0_52 = arith.constant 0 : index
    %66 = arith.index_cast %65 : i32 to index
    %c0_53 = arith.constant 0 : index
    %c0_54 = arith.constant 0 : index
    %67 = vector.load %arg2[%c0_52, %66, %c0_53, %c0_54] : memref<1x17x17x4xbf16, #tpu.memory_space<vmem>>, vector<1x8x16x4xbf16>
    %68 = vector.shape_cast %67 : vector<1x8x16x4xbf16> to vector<8x16x4xbf16>
    %69 = vector.shape_cast %68 : vector<8x16x4xbf16> to vector<128x4xbf16>
    %c0_i32_55 = arith.constant 0 : i32
    %70 = arith.addi %0, %c0_i32_55 : i32
    %c0_56 = arith.constant 0 : index
    %71 = arith.index_cast %70 : i32 to index
    %c0_57 = arith.constant 0 : index
    %c0_58 = arith.constant 0 : index
    %72 = vector.load %arg2[%c0_56, %71, %c0_57, %c0_58] : memref<1x17x17x4xbf16, #tpu.memory_space<vmem>>, vector<1x8x16x4xbf16>
    %73 = vector.shape_cast %72 : vector<1x8x16x4xbf16> to vector<8x16x4xbf16>
    %74 = vector.shape_cast %73 : vector<8x16x4xbf16> to vector<128x4xbf16>
    %c0_i32_59 = arith.constant 0 : i32
    %75 = arith.addi %0, %c0_i32_59 : i32
    %c0_60 = arith.constant 0 : index
    %76 = arith.index_cast %75 : i32 to index
    %c0_61 = arith.constant 0 : index
    %c0_62 = arith.constant 0 : index
    %77 = vector.load %arg2[%c0_60, %76, %c0_61, %c0_62] : memref<1x17x17x4xbf16, #tpu.memory_space<vmem>>, vector<1x8x16x4xbf16>
    %78 = vector.shape_cast %77 : vector<1x8x16x4xbf16> to vector<8x16x4xbf16>
    %79 = vector.shape_cast %78 : vector<8x16x4xbf16> to vector<128x4xbf16>
    %80 = tpu.concatenate %64, %69, %74, %79 in 1 : vector<128x4xbf16>, vector<128x4xbf16>, vector<128x4xbf16>, vector<128x4xbf16> -> vector<128x16xbf16>
    %c2 = arith.constant 2 : index
    %c0_63 = arith.constant 0 : index
    %c0_64 = arith.constant 0 : index
    %81 = vector.load %arg3[%c2, %c0_63, %c0_64] : memref<4x8x16xbf16, #tpu.memory_space<vmem>>, vector<1x8x16xbf16>
    %82 = vector.shape_cast %81 : vector<1x8x16xbf16> to vector<8x16xbf16>
    %cst_65 = arith.constant dense<0.000000e+00> : vector<8x128xf32>
    %83 = tpu.matmul %82, %80, %cst_65 {dimension_numbers = #tpu.dot_dimension_numbers<[1], [1], [0], [0], [0, 0, 1, 0], [], []>} : vector<8x16xbf16>, vector<128x16xbf16>, vector<8x128xf32> -> vector<8x128xf32>
    %84 = vector.broadcast %1 : vector<8x1xf32> to vector<8x128xf32>
    %85 = arith.addf %83, %84 : vector<8x128xf32>
    %c0_66 = arith.constant 0 : index
    %c1_67 = arith.constant 1 : index
    %c0_68 = arith.constant 0 : index
    %c0_69 = arith.constant 0 : index
    %c0_70 = arith.constant 0 : index
    %86 = vector.load %arg5[%c0_66, %c1_67, %c0_68, %c0_69, %c0_70] : memref<1x2x2x8x128xf32, #tpu.memory_space<vmem>>, vector<1x1x1x8x128xf32>
    %87 = vector.shape_cast %86 : vector<1x1x1x8x128xf32> to vector<8x128xf32>
    %88 = vector.shape_cast %85 : vector<8x128xf32> to vector<1x1x1x8x128xf32>
    tpu.vector_store %arg5[%c0_66, %c1_67, %c0_68, %c0_69, %c0_70], %88 {strides = array<i32>} : memref<1x2x2x8x128xf32, #tpu.memory_space<vmem>>, vector<1x1x1x8x128xf32>,
    %c1_i32_71 = arith.constant 1 : i32
    %89 = arith.addi %0, %c1_i32_71 : i32
    %c0_72 = arith.constant 0 : index
    %90 = arith.index_cast %89 : i32 to index
    %c1_73 = arith.constant 1 : index
    %c0_74 = arith.constant 0 : index
    %91 = vector.load %arg2[%c0_72, %90, %c1_73, %c0_74] : memref<1x17x17x4xbf16, #tpu.memory_space<vmem>>, vector<1x8x16x4xbf16>
    %92 = vector.shape_cast %91 : vector<1x8x16x4xbf16> to vector<8x16x4xbf16>
    %93 = vector.shape_cast %92 : vector<8x16x4xbf16> to vector<128x4xbf16>
    %c1_i32_75 = arith.constant 1 : i32
    %94 = arith.addi %0, %c1_i32_75 : i32
    %c0_76 = arith.constant 0 : index
    %95 = arith.index_cast %94 : i32 to index
    %c0_77 = arith.constant 0 : index
    %c0_78 = arith.constant 0 : index
    %96 = vector.load %arg2[%c0_76, %95, %c0_77, %c0_78] : memref<1x17x17x4xbf16, #tpu.memory_space<vmem>>, vector<1x8x16x4xbf16>
    %97 = vector.shape_cast %96 : vector<1x8x16x4xbf16> to vector<8x16x4xbf16>
    %98 = vector.shape_cast %97 : vector<8x16x4xbf16> to vector<128x4xbf16>
    %c0_i32_79 = arith.constant 0 : i32
    %99 = arith.addi %0, %c0_i32_79 : i32
    %c0_80 = arith.constant 0 : index
    %100 = arith.index_cast %99 : i32 to index
    %c1_81 = arith.constant 1 : index
    %c0_82 = arith.constant 0 : index
    %101 = vector.load %arg2[%c0_80, %100, %c1_81, %c0_82] : memref<1x17x17x4xbf16, #tpu.memory_space<vmem>>, vector<1x8x16x4xbf16>
    %102 = vector.shape_cast %101 : vector<1x8x16x4xbf16> to vector<8x16x4xbf16>
    %103 = vector.shape_cast %102 : vector<8x16x4xbf16> to vector<128x4xbf16>
    %c0_i32_83 = arith.constant 0 : i32
    %104 = arith.addi %0, %c0_i32_83 : i32
    %c0_84 = arith.constant 0 : index
    %105 = arith.index_cast %104 : i32 to index
    %c0_85 = arith.constant 0 : index
    %c0_86 = arith.constant 0 : index
    %106 = vector.load %arg2[%c0_84, %105, %c0_85, %c0_86] : memref<1x17x17x4xbf16, #tpu.memory_space<vmem>>, vector<1x8x16x4xbf16>
    %107 = vector.shape_cast %106 : vector<1x8x16x4xbf16> to vector<8x16x4xbf16>
    %108 = vector.shape_cast %107 : vector<8x16x4xbf16> to vector<128x4xbf16>
    %109 = tpu.concatenate %93, %98, %103, %108 in 1 : vector<128x4xbf16>, vector<128x4xbf16>, vector<128x4xbf16>, vector<128x4xbf16> -> vector<128x16xbf16>
    %c3 = arith.constant 3 : index
    %c0_87 = arith.constant 0 : index
    %c0_88 = arith.constant 0 : index
    %110 = vector.load %arg3[%c3, %c0_87, %c0_88] : memref<4x8x16xbf16, #tpu.memory_space<vmem>>, vector<1x8x16xbf16>
    %111 = vector.shape_cast %110 : vector<1x8x16xbf16> to vector<8x16xbf16>
    %cst_89 = arith.constant dense<0.000000e+00> : vector<8x128xf32>
    %112 = tpu.matmul %111, %109, %cst_89 {dimension_numbers = #tpu.dot_dimension_numbers<[1], [1], [0], [0], [0, 0, 1, 0], [], []>} : vector<8x16xbf16>, vector<128x16xbf16>, vector<8x128xf32> -> vector<8x128xf32>
    %113 = vector.broadcast %1 : vector<8x1xf32> to vector<8x128xf32>
    %114 = arith.addf %112, %113 : vector<8x128xf32>
    %c0_90 = arith.constant 0 : index
    %c1_91 = arith.constant 1 : index
    %c1_92 = arith.constant 1 : index
    %c0_93 = arith.constant 0 : index
    %c0_94 = arith.constant 0 : index
    %115 = vector.load %arg5[%c0_90, %c1_91, %c1_92, %c0_93, %c0_94] : memref<1x2x2x8x128xf32, #tpu.memory_space<vmem>>, vector<1x1x1x8x128xf32>
    %116 = vector.shape_cast %115 : vector<1x1x1x8x128xf32> to vector<8x128xf32>
    %117 = vector.shape_cast %114 : vector<8x128xf32> to vector<1x1x1x8x128xf32>
    tpu.vector_store %arg5[%c0_90, %c1_91, %c1_92, %c0_93, %c0_94], %117 {strides = array<i32>} : memref<1x2x2x8x128xf32, #tpu.memory_space<vmem>>, vector<1x1x1x8x128xf32>,
    return
  }
  func.func @transform_0(%arg0: i32, %arg1: i32) -> (i32, i32, i32, i32) {
    %c0_i32 = arith.constant 0 : i32
    %c0_i32_0 = arith.constant 0 : i32
    %c0_i32_1 = arith.constant 0 : i32
    %c0_i32_2 = arith.constant 0 : i32
    return %arg0, %c0_i32, %c0_i32_0, %c0_i32_1 : i32, i32, i32, i32
  }
  func.func @transform_1(%arg0: i32, %arg1: i32) -> (i32, i32, i32) {
    %c0_i32 = arith.constant 0 : i32
    %c0_i32_0 = arith.constant 0 : i32
    %c0_i32_1 = arith.constant 0 : i32
    %c0_i32_2 = arith.constant 0 : i32
    return %c0_i32, %c0_i32_0, %c0_i32_1 : i32, i32, i32
  }
  func.func @transform_2(%arg0: i32, %arg1: i32) -> (i32, i32) {
    %c0_i32 = arith.constant 0 : i32
    %c0_i32_0 = arith.constant 0 : i32
    %c0_i32_1 = arith.constant 0 : i32
    return %c0_i32, %c0_i32_0 : i32, i32
  }
  func.func @transform_3(%arg0: i32, %arg1: i32) -> (i32, i32, i32, i32, i32) {
    %c0_i32 = arith.constant 0 : i32
    %c0_i32_0 = arith.constant 0 : i32
    %c0_i32_1 = arith.constant 0 : i32
    %c0_i32_2 = arith.constant 0 : i32
    return %arg0, %c0_i32, %c0_i32_0, %c0_i32_1, %arg1 : i32, i32, i32, i32, i32
  }
}

</mosaic_0001>

<llo_original>
// kernel: tpu_custom_call.1
$region0: #{tpu_custom_call.1}
  #allocation0 [shape = 'u32[]', space=smem, size = 0x4, offset = 0x4, fixed_abs, tag = 'smem constant byte address 0x4 - core index']
  #allocation1 [shape = 'u32[72,128]{1,0:T(1,128)}', space=vmem, size = 0x9000, scoped, tag = 'internal scratch']
  %s0 = inlined_call_operand.vmem [shape: bf16[2,17,17,4], index: 0, kind: input, shape index: {}]
  %s1 = inlined_call_operand.vmem [shape: bf16[4,8,16], index: 1, kind: input, shape index: {}]
  %s2 = inlined_call_operand.vmem [shape: f32[8,1], index: 2, kind: input, shape index: {}]
  %s3 = inlined_call_operand.hbm [shape: f32[2,2,2,8,256], index: 3, kind: output, shape index: {}]
  %s4 = sld [smem:[#allocation0]]
  $region45: #{tpu_custom_call.1} parent=0
    _
  %s6 = ssub.s32 1, %s4
  %s7 = scalar_select 0, %s6, %s4
  $region1: #{tpu_custom_call.1} parent=0
    #allocation2 [shape = 'u8[32768]{0}', space=vmem, size = 0x8000, scoped, tag = 'output window, operand 0']
    #allocation3 [shape = 's32[2]{0}', space=sflag, size = 0x8, scoped, tag = 'scoped memory for tpu_custom_call.1']
    %8 = vsyncpa [#allocation3], 0
    %s9 = scalar_lea.sflag [#allocation3], 1
    %10 = vsyncpa %s9, 0
    loop: start=0, step=1, limit=6
    $region2: #{tpu_custom_call.1} parent=1 // loop_pre_header
      _
    $region3: #{tpu_custom_call.1} parent=1 // loop_header
      %s12 = sphi 0, %s16
      %p13 = scmp.ge.s32.totalorder %s12, 6
      %s19 = sphi 0, %s31
      %s20 = sphi 0, %s27
      %s21 = sphi 0, %s19
      %s22 = sphi 0, %s20
      %s23 = sphi 0, %s21
      %s24 = sphi 0, %s22
      %s34 = sphi 0, %s36
      %s37 = sphi 0, %s34
      %s38 = sphi 0, %s37
      %s54 = sphi 0, %s38
      %s58 = sphi 0, %s58
      %s60 = sphi 0, %s58
      %s61 = sphi 0, %s60
      %s75 = sphi 0, %s61
      %s79 = sphi 0, %s79
      %s81 = sphi 0, %s79
      %s82 = sphi 0, %s81
      %s96 = sphi 0, %s82
      %s104 = sphi 0, %s106
      %s107 = sphi 0, %s104
      %s108 = sphi 0, %s107
      %s124 = sphi 0, %s108
    $region4: #{tpu_custom_call.1} parent=1 // loop_header_branch
      %15 = sbr.rel (%p13) target = $region8
    $region5: #{tpu_custom_call.1} parent=1 // loop_body
      %s17 = ssub.s32 %s12, 1
      %s18 = ssub.s32 %s12, 2
      %s25 = sadd.s32 1, %s20
      %p26 = scmp.ge.s32.totalorder %s25, 2
      %s27 = scalar_select %p26, 0, %s25
      %s28 = sadd.s32 1, %s19
      %s29 = scalar_select %p26, %s28, %s19
      %p30 = scmp.ge.s32.totalorder %s29, 2
      %s31 = scalar_select %p30, 0, %s29
      %s32 = ssub.s32 %s19, %s31
      %p33 = scmp.eq.s32.totalorder %s32, 0
      %s35 = sadd.s32 %s34, 1
      %s36 = scalar_select %p33, %s34, %s35
      %p39 = pneg %p33
      %p40 = scmp.eq.s32.totalorder %s12, 3
      %p41 = por %p39, %p40
      %p42 = scmp.ne.s32.totalorder %s34, %s37
      %p43 = scmp.eq.s32.totalorder %s12, 0
      %p44 = por %p42, %p43
      %p45 = scmp.ne.s32.totalorder %s34, %s37
      %p46 = scmp.eq.s32.totalorder %s17, 3
      %p47 = por %p45, %p46
      %p48 = scmp.ne.s32.totalorder %s37, %s38
      %p49 = scmp.eq.s32.totalorder %s17, 0
      %p50 = por %p48, %p49
      %p51 = scmp.ne.s32.totalorder %s37, %s38
      %p52 = scmp.eq.s32.totalorder %s18, 3
      %p53 = por %p51, %p52
      %p55 = scmp.ne.s32.totalorder %s38, %s54
      %p56 = scmp.eq.s32.totalorder %s18, 0
      %p57 = por %p55, %p56
      %s59 = sadd.s32 %s58, 1
      %p62 = scmp.eq.s32.totalorder %s12, 3
      %p63 = scmp.ne.s32.totalorder %s58, %s60
      %p64 = scmp.eq.s32.totalorder %s12, 0
      %p65 = por %p63, %p64
      %p66 = scmp.ne.s32.totalorder %s58, %s60
      %p67 = scmp.eq.s32.totalorder %s17, 3
      %p68 = por %p66, %p67
      %p69 = scmp.ne.s32.totalorder %s60, %s61
      %p70 = scmp.eq.s32.totalorder %s17, 0
      %p71 = por %p69, %p70
      %p72 = scmp.ne.s32.totalorder %s60, %s61
      %p73 = scmp.eq.s32.totalorder %s18, 3
      %p74 = por %p72, %p73
      %p76 = scmp.ne.s32.totalorder %s61, %s75
      %p77 = scmp.eq.s32.totalorder %s18, 0
      %p78 = por %p76, %p77
      %s80 = sadd.s32 %s79, 1
      %p83 = scmp.eq.s32.totalorder %s12, 3
      %p84 = scmp.ne.s32.totalorder %s79, %s81
      %p85 = scmp.eq.s32.totalorder %s12, 0
      %p86 = por %p84, %p85
      %p87 = scmp.ne.s32.totalorder %s79, %s81
      %p88 = scmp.eq.s32.totalorder %s17, 3
      %p89 = por %p87, %p88
      %p90 = scmp.ne.s32.totalorder %s81, %s82
      %p91 = scmp.eq.s32.totalorder %s17, 0
      %p92 = por %p90, %p91
      %p93 = scmp.ne.s32.totalorder %s81, %s82
      %p94 = scmp.eq.s32.totalorder %s18, 3
      %p95 = por %p93, %p94
      %p97 = scmp.ne.s32.totalorder %s82, %s96
      %p98 = scmp.eq.s32.totalorder %s18, 0
      %p99 = por %p97, %p98
      %s100 = ssub.s32 %s19, %s31
      %s101 = ssub.s32 %s20, %s27
      %s102 = sor.u32 %s100, %s101
      %p103 = scmp.eq.s32.totalorder %s102, 0
      %s105 = sadd.s32 %s104, 1
      %s106 = scalar_select %p103, %s104, %s105
      %p109 = pneg %p103
      %p110 = scmp.eq.s32.totalorder %s12, 3
      %p111 = por %p109, %p110
      %p112 = scmp.ne.s32.totalorder %s104, %s107
      %p113 = scmp.eq.s32.totalorder %s12, 0
      %p114 = por %p112, %p113
      %p115 = scmp.ne.s32.totalorder %s104, %s107
      %p116 = scmp.eq.s32.totalorder %s17, 3
      %p117 = por %p115, %p116
      %p118 = scmp.ne.s32.totalorder %s107, %s108
      %p119 = scmp.eq.s32.totalorder %s17, 0
      %p120 = por %p118, %p119
      %p121 = scmp.ne.s32.totalorder %s107, %s108
      %p122 = scmp.eq.s32.totalorder %s18, 3
      %p123 = por %p121, %p122
      %p125 = scmp.ne.s32.totalorder %s108, %s124
      %p126 = scmp.eq.s32.totalorder %s18, 0
      %p127 = por %p125, %p126
      %p128 = scmp.le.s32.totalorder 1, %s12
      %p129 = scmp.lt.s32.totalorder %s12, 5
      %p130 = pnand %p128, %p129
      %p131 = pneg %p130
      // Predicated region
      $region9: #{tpu_custom_call.1} parent=5 // pred_check
        _
      $region10: #{tpu_custom_call.1} parent=5 // pred_check_branch
        %133 = sbr.rel (%p130) target = $region12
      $region11: #{tpu_custom_call.1} parent=5 // pred_region
        %s134 = ssub.s32 %s12, 1
        // Predicated region
        $region13: #{tpu_custom_call.1} parent=11 // pred_check
          %p135 = pneg %p71
        $region14: #{tpu_custom_call.1} parent=11 // pred_check_branch
          %137 = sbr.rel (%p135) target = $region16
        $region15: #{tpu_custom_call.1} parent=11 // pred_region
          _
        $region16: #{tpu_custom_call.1} parent=11 // pred_fallthru
          _
        // Predicated region
        $region17: #{tpu_custom_call.1} parent=11 // pred_check
          %p138 = pneg %p92
        $region18: #{tpu_custom_call.1} parent=11 // pred_check_branch
          %140 = sbr.rel (%p138) target = $region20
        $region19: #{tpu_custom_call.1} parent=11 // pred_region
          _
        $region20: #{tpu_custom_call.1} parent=11 // pred_fallthru
          _
      $region12: #{tpu_custom_call.1} parent=5 // pred_fallthru
        _
      %p141 = scmp.lt.s32.totalorder %s12, 4
      // Predicated region
      $region21: #{tpu_custom_call.1} parent=5 // pred_check
        %p142 = pneg %p141
      $region22: #{tpu_custom_call.1} parent=5 // pred_check_branch
        %144 = sbr.rel (%p142) target = $region24
      $region23: #{tpu_custom_call.1} parent=5 // pred_region
        // Predicated region
        $region25: #{tpu_custom_call.1} parent=23 // pred_check
          %p145 = pneg %p44
        $region26: #{tpu_custom_call.1} parent=23 // pred_check_branch
          %147 = sbr.rel (%p145) target = $region28
        $region27: #{tpu_custom_call.1} parent=23 // pred_region
          %p148 = scmp.lt.s32.totalorder %s19, 1
          %s149 = scalar_select %p148, %s19, 1
          %s150 = smul.addr %s149, 51
          %s151 = smul.addr %s150, 4
          %s152 = scalar_lea.vmem %s0, %s151
        $region28: #{tpu_custom_call.1} parent=23 // pred_fallthru
          _
      $region24: #{tpu_custom_call.1} parent=5 // pred_fallthru
        _
      %p153 = scmp.le.s32.totalorder 1, %s12
      %p154 = scmp.lt.s32.totalorder %s12, 5
      %p155 = pnand %p153, %p154
      %p156 = pneg %p155
      // Predicated region
      $region29: #{tpu_custom_call.1} parent=5 // pred_check
        _
      $region30: #{tpu_custom_call.1} parent=5 // pred_check_branch
        %158 = sbr.rel (%p155) target = $region32
      $region31: #{tpu_custom_call.1} parent=5 // pred_region
        %s159 = ssub.s32 %s12, 1
        %p160 = scmp.lt.s32.totalorder %s21, 1
        %s161 = scalar_select %p160, %s21, 1
        %s162 = smul.addr %s161, 51
        %s163 = smul.addr %s162, 4
        %s164 = scalar_lea.vmem %s0, %s163
        %p165 = pneg %p50
        %p166 = pneg %p47
        %p167 = pneg %p71
        %p168 = pneg %p68
        %p169 = pneg %p92
        %p170 = pneg %p89
        %p171 = pneg %p120
        %p172 = pneg %p117
        %s173 = sand.u32 %s107, 1
        %s174 = scalar_lea.sflag [#allocation3], %s173
        %s175 = sand.u32 %s107, 1
        %s176 = smul.addr %s175, 32
        %s177 = scalar_lea.vmem [#allocation2], %s176
        %p178 = scmp.lt.s32.totalorder %s21, 1
        %s179 = scalar_select %p178, %s21, 1
        %s180 = smul.addr %s179, 51
        %s181 = smul.addr %s180, 4
        %s182 = scalar_lea.vmem %s0, %s181
        %s183 = smul.u32 %s22, 8
        %v184 = vld [vmem:[%s2] sm:$0xff]
        %s185 = smul.u32 %s183, 3
        %s186 = smul.addr %s185, 4
        %s187 = scalar_lea.vmem %s182, %s186
        %v188 = vld [vmem:[%s187] sm:$0xf]
        %v189 = vld [vmem:[%s187 + $0x4] sm:$0xf]
        %v190 = vld [vmem:[%s187 + $0xc] sm:$0xf]
        %v191 = vld [vmem:[%s187 + $0x10] sm:$0xf]
        %v192 = vld [vmem:[%s187 + $0x18] sm:$0xf]
        %v193 = vld [vmem:[%s187 + $0x1c] sm:$0xf]
        %v194 = vld [vmem:[%s187 + $0x24] sm:$0xf]
        %v195 = vld [vmem:[%s187 + $0x28] sm:$0xf]
        %v196 = vld [vmem:[%s187 + $0x30] sm:$0xf]
        %v197 = vld [vmem:[%s187 + $0x34] sm:$0xf]
        %v198 = vld [vmem:[%s187 + $0x3c] sm:$0xf]
        %v199 = vld [vmem:[%s187 + $0x40] sm:$0xf]
        %v200 = vld [vmem:[%s187 + $0x48] sm:$0xf]
        %v201 = vld [vmem:[%s187 + $0x4c] sm:$0xf]
        %v202 = vld [vmem:[%s187 + $0x54] sm:$0xf]
        %v203 = vld [vmem:[%s187 + $0x58] sm:$0xf]
        %v220 = vunpack.c.l.b16 %v188
        %v221 = vunpack.c.l.b16 %v189
        %v222 = vunpack.c.l.b16 %v190
        %v223 = vunpack.c.l.b16 %v191
        %v224 = vunpack.c.l.b16 %v192
        %v225 = vunpack.c.l.b16 %v193
        %v226 = vunpack.c.l.b16 %v194
        %v227 = vunpack.c.l.b16 %v195
        %v228 = vunpack.c.l.b16 %v196
        %v229 = vunpack.c.l.b16 %v197
        %v230 = vunpack.c.l.b16 %v198
        %v231 = vunpack.c.l.b16 %v199
        %v232 = vunpack.c.l.b16 %v200
        %v233 = vunpack.c.l.b16 %v201
        %v234 = vunpack.c.l.b16 %v202
        %v235 = vunpack.c.l.b16 %v203
        %v236 = vpack.c.b16 %v221, %v220
        %v237 = vpack.c.b16 %v223, %v222
        %v238 = vpack.c.b16 %v225, %v224
        %v239 = vpack.c.b16 %v227, %v226
        %v240 = vpack.c.b16 %v229, %v228
        %v241 = vpack.c.b16 %v231, %v230
        %v242 = vpack.c.b16 %v233, %v232
        %v243 = vpack.c.b16 %v235, %v234
        %244 = vrot.lane.b32.xlu0 %v236, 4
        %v245 = vpop.permute.xlu0 %244
        %246 = vrot.lane.b32.xlu0 %v237, 4
        %v247 = vpop.permute.xlu0 %246
        %248 = vrot.lane.b32.xlu0 %v238, 4
        %v249 = vpop.permute.xlu0 %248
        %250 = vrot.lane.b32.xlu0 %v239, 4
        %v251 = vpop.permute.xlu0 %250
        %252 = vrot.lane.b32.xlu0 %v240, 4
        %v253 = vpop.permute.xlu0 %252
        %254 = vrot.lane.b32.xlu0 %v241, 4
        %v255 = vpop.permute.xlu0 %254
        %256 = vrot.lane.b32.xlu0 %v242, 4
        %v257 = vpop.permute.xlu0 %256
        %258 = vrot.lane.b32.xlu0 %v243, 4
        %v259 = vpop.permute.xlu0 %258
        %260 = vrot.lane.b32.xlu0 %v236, 8
        %v261 = vpop.permute.xlu0 %260
        %262 = vrot.lane.b32.xlu0 %v237, 8
        %v263 = vpop.permute.xlu0 %262
        %264 = vrot.lane.b32.xlu0 %v238, 8
        %v265 = vpop.permute.xlu0 %264
        %266 = vrot.lane.b32.xlu0 %v239, 8
        %v267 = vpop.permute.xlu0 %266
        %268 = vrot.lane.b32.xlu0 %v240, 8
        %v269 = vpop.permute.xlu0 %268
        %270 = vrot.lane.b32.xlu0 %v241, 8
        %v271 = vpop.permute.xlu0 %270
        %272 = vrot.lane.b32.xlu0 %v242, 8
        %v273 = vpop.permute.xlu0 %272
        %274 = vrot.lane.b32.xlu0 %v243, 8
        %v275 = vpop.permute.xlu0 %274
        %276 = vrot.lane.b32.xlu0 %v236, 12
        %v277 = vpop.permute.xlu0 %276
        %278 = vrot.lane.b32.xlu0 %v237, 12
        %v279 = vpop.permute.xlu0 %278
        %280 = vrot.lane.b32.xlu0 %v238, 12
        %v281 = vpop.permute.xlu0 %280
        %282 = vrot.lane.b32.xlu0 %v239, 12
        %v283 = vpop.permute.xlu0 %282
        %284 = vrot.lane.b32.xlu0 %v240, 12
        %v285 = vpop.permute.xlu0 %284
        %286 = vrot.lane.b32.xlu0 %v241, 12
        %v287 = vpop.permute.xlu0 %286
        %288 = vrot.lane.b32.xlu0 %v242, 12
        %v289 = vpop.permute.xlu0 %288
        %290 = vrot.lane.b32.xlu0 %v243, 12
        %v291 = vpop.permute.xlu0 %290
        %vm292 = vcmask 31744
        %v295 = vsel %vm292, %v236, %v245
        %v298 = vsel %vm292, %v237, %v247
        %v301 = vsel %vm292, %v238, %v249
        %v304 = vsel %vm292, %v239, %v251
        %v307 = vsel %vm292, %v240, %v253
        %v310 = vsel %vm292, %v241, %v255
        %v313 = vsel %vm292, %v242, %v257
        %v316 = vsel %vm292, %v243, %v259
        %vm317 = vcmask 64512
        %v319 = vsel %vm317, %v295, %v261
        %v321 = vsel %vm317, %v298, %v263
        %v323 = vsel %vm317, %v301, %v265
        %v325 = vsel %vm317, %v304, %v267
        %v327 = vsel %vm317, %v307, %v269
        %v329 = vsel %vm317, %v310, %v271
        %v331 = vsel %vm317, %v313, %v273
        %v333 = vsel %vm317, %v316, %v275
        %vm334 = vcmask 97280
        %v336 = vsel %vm334, %v319, %v277
        %v338 = vsel %vm334, %v321, %v279
        %v340 = vsel %vm334, %v323, %v281
        %v342 = vsel %vm334, %v325, %v283
        %v344 = vsel %vm334, %v327, %v285
        %v346 = vsel %vm334, %v329, %v287
        %v348 = vsel %vm334, %v331, %v289
        %v350 = vsel %vm334, %v333, %v291
        %v351 = vld [vmem:[%s1] sm:$0xf]
        %353 = vset.pattern.permute.xlu0 0
        %354 = vperm.xlu0 %353, %v184
        %v355 = vpop.permute.xlu0 %354
        %vm357 = vcmask 130048
        %v359 = vsel %vm357, %v351, 0
        %v361 = vsel %vm357, %v336, 0
        %v363 = vsel %vm357, %v338, 0
        %v365 = vsel %vm357, %v340, 0
        %v367 = vsel %vm357, %v342, 0
        %v369 = vsel %vm357, %v344, 0
        %v371 = vsel %vm357, %v346, 0
        %v373 = vsel %vm357, %v348, 0
        %v375 = vsel %vm357, %v350, 0
        %377 = vmatpush.bf16.xpose.msra.mxu0 %v375
        %378 = vmatpush.bf16.xpose.msra.mxu0 %v373
        %379 = vmatpush.bf16.xpose.msra.mxu0 %v371
        %380 = vmatpush.bf16.xpose.msra.mxu0 %v369
        %381 = vmatpush.bf16.xpose.msra.mxu0 %v367
        %382 = vmatpush.bf16.xpose.msra.mxu0 %v365
        %383 = vmatpush.bf16.xpose.msra.mxu0 %v363
        %384 = vmatpush.bf16.xpose.msra.mxu0 %v361
        %385 = vmatmul.bf16.gmra.mxu0 %v359
        %v386 = vpop.f32.mrf.mxu0
        %v387 = vadd.f32 %v355, %v386
        %v388 = vpop.f32.mrf.mxu0
        %389 = vdwg.mxu0
        %390 = vst [vmem:[%s177] sm:$0xff] %v387
        %v391 = vld [vmem:[%s187] sm:$0xf]
        %v392 = vld [vmem:[%s187 + $0x4] sm:$0xf]
        %v393 = vld [vmem:[%s187 + $0x8] sm:$0x1]
        %v394 = vld [vmem:[%s187 + $0xc] sm:$0xf]
        %v395 = vld [vmem:[%s187 + $0x10] sm:$0xf]
        %v396 = vld [vmem:[%s187 + $0x14] sm:$0x1]
        %v397 = vld [vmem:[%s187 + $0x18] sm:$0xf]
        %v398 = vld [vmem:[%s187 + $0x1c] sm:$0xf]
        %v399 = vld [vmem:[%s187 + $0x20] sm:$0x1]
        %v400 = vld [vmem:[%s187 + $0x24] sm:$0xf]
        %v401 = vld [vmem:[%s187 + $0x28] sm:$0xf]
        %v402 = vld [vmem:[%s187 + $0x2c] sm:$0x1]
        %v403 = vld [vmem:[%s187 + $0x30] sm:$0xf]
        %v404 = vld [vmem:[%s187 + $0x34] sm:$0xf]
        %v405 = vld [vmem:[%s187 + $0x38] sm:$0x1]
        %v406 = vld [vmem:[%s187 + $0x3c] sm:$0xf]
        %v407 = vld [vmem:[%s187 + $0x40] sm:$0xf]
        %v408 = vld [vmem:[%s187 + $0x44] sm:$0x1]
        %v409 = vld [vmem:[%s187 + $0x48] sm:$0xf]
        %v410 = vld [vmem:[%s187 + $0x4c] sm:$0xf]
        %v411 = vld [vmem:[%s187 + $0x50] sm:$0x1]
        %v412 = vld [vmem:[%s187 + $0x54] sm:$0xf]
        %v413 = vld [vmem:[%s187 + $0x58] sm:$0xf]
        %v414 = vld [vmem:[%s187 + $0x5c] sm:$0x1]
        %vm415 = vsmask.f32 3328
        %vm416 = vsmask.f32 7440
        %vm417 = vmor %vm415, %vm416
        %v419 = vshrl.u32 %v391, 16
        %v421 = vrot.slane %v419, 4
        %v422 = vshll.u32 %v391, 16
        %v424 = vrot.slane %v422, 5
        %v425 = vor.u32 %v421, %v424
        %v426 = vrot.slane %v425, 4
        %v428 = vshll.u32 %v392, 16
        %v430 = vrot.slane %v428, 5
        %v431 = vsel %vm417, %v426, %v430
        %v432 = vshrl.u32 %v392, 16
        %v434 = vrot.slane %v432, 4
        %v435 = vor.u32 %v434, %v430
        %v436 = vrot.slane %v435, 4
        %v438 = vshll.u32 %v393, 16
        %v440 = vrot.slane %v438, 5
        %v441 = vsel %vm417, %v436, %v440
        %v443 = vshrl.u32 %v394, 16
        %v445 = vrot.slane %v443, 4
        %v446 = vshll.u32 %v394, 16
        %v448 = vrot.slane %v446, 5
        %v449 = vor.u32 %v445, %v448
        %v450 = vrot.slane %v449, 4
        %v452 = vshll.u32 %v395, 16
        %v454 = vrot.slane %v452, 5
        %v455 = vsel %vm417, %v450, %v454
        %v456 = vshrl.u32 %v395, 16
        %v458 = vrot.slane %v456, 4
        %v459 = vor.u32 %v458, %v454
        %v460 = vrot.slane %v459, 4
        %v462 = vshll.u32 %v396, 16
        %v464 = vrot.slane %v462, 5
        %v465 = vsel %vm417, %v460, %v464
        %v467 = vshrl.u32 %v397, 16
        %v469 = vrot.slane %v467, 4
        %v470 = vshll.u32 %v397, 16
        %v472 = vrot.slane %v470, 5
        %v473 = vor.u32 %v469, %v472
        %v474 = vrot.slane %v473, 4
        %v476 = vshll.u32 %v398, 16
        %v478 = vrot.slane %v476, 5
        %v479 = vsel %vm417, %v474, %v478
        %v480 = vshrl.u32 %v398, 16
        %v482 = vrot.slane %v480, 4
        %v483 = vor.u32 %v482, %v478
        %v484 = vrot.slane %v483, 4
        %v486 = vshll.u32 %v399, 16
        %v488 = vrot.slane %v486, 5
        %v489 = vsel %vm417, %v484, %v488
        %v491 = vshrl.u32 %v400, 16
        %v493 = vrot.slane %v491, 4
        %v494 = vshll.u32 %v400, 16
        %v496 = vrot.slane %v494, 5
        %v497 = vor.u32 %v493, %v496
        %v498 = vrot.slane %v497, 4
        %v500 = vshll.u32 %v401, 16
        %v502 = vrot.slane %v500, 5
        %v503 = vsel %vm417, %v498, %v502
        %v504 = vshrl.u32 %v401, 16
        %v506 = vrot.slane %v504, 4
        %v507 = vor.u32 %v506, %v502
        %v508 = vrot.slane %v507, 4
        %v510 = vshll.u32 %v402, 16
        %v512 = vrot.slane %v510, 5
        %v513 = vsel %vm417, %v508, %v512
        %v515 = vshrl.u32 %v403, 16
        %v517 = vrot.slane %v515, 4
        %v518 = vshll.u32 %v403, 16
        %v520 = vrot.slane %v518, 5
        %v521 = vor.u32 %v517, %v520
        %v522 = vrot.slane %v521, 4
        %v524 = vshll.u32 %v404, 16
        %v526 = vrot.slane %v524, 5
        %v527 = vsel %vm417, %v522, %v526
        %v528 = vshrl.u32 %v404, 16
        %v530 = vrot.slane %v528, 4
        %v531 = vor.u32 %v530, %v526
        %v532 = vrot.slane %v531, 4
        %v534 = vshll.u32 %v405, 16
        %v536 = vrot.slane %v534, 5
        %v537 = vsel %vm417, %v532, %v536
        %v539 = vshrl.u32 %v406, 16
        %v541 = vrot.slane %v539, 4
        %v542 = vshll.u32 %v406, 16
        %v544 = vrot.slane %v542, 5
        %v545 = vor.u32 %v541, %v544
        %v546 = vrot.slane %v545, 4
        %v548 = vshll.u32 %v407, 16
        %v550 = vrot.slane %v548, 5
        %v551 = vsel %vm417, %v546, %v550
        %v552 = vshrl.u32 %v407, 16
        %v554 = vrot.slane %v552, 4
        %v555 = vor.u32 %v554, %v550
        %v556 = vrot.slane %v555, 4
        %v558 = vshll.u32 %v408, 16
        %v560 = vrot.slane %v558, 5
        %v561 = vsel %vm417, %v556, %v560
        %v563 = vshrl.u32 %v409, 16
        %v565 = vrot.slane %v563, 4
        %v566 = vshll.u32 %v409, 16
        %v568 = vrot.slane %v566, 5
        %v569 = vor.u32 %v565, %v568
        %v570 = vrot.slane %v569, 4
        %v572 = vshll.u32 %v410, 16
        %v574 = vrot.slane %v572, 5
        %v575 = vsel %vm417, %v570, %v574
        %v576 = vshrl.u32 %v410, 16
        %v578 = vrot.slane %v576, 4
        %v579 = vor.u32 %v578, %v574
        %v580 = vrot.slane %v579, 4
        %v582 = vshll.u32 %v411, 16
        %v584 = vrot.slane %v582, 5
        %v585 = vsel %vm417, %v580, %v584
        %v587 = vshrl.u32 %v412, 16
        %v589 = vrot.slane %v587, 4
        %v590 = vshll.u32 %v412, 16
        %v592 = vrot.slane %v590, 5
        %v593 = vor.u32 %v589, %v592
        %v594 = vrot.slane %v593, 4
        %v596 = vshll.u32 %v413, 16
        %v598 = vrot.slane %v596, 5
        %v599 = vsel %vm417, %v594, %v598
        %v600 = vshrl.u32 %v413, 16
        %v602 = vrot.slane %v600, 4
        %v603 = vor.u32 %v602, %v598
        %v604 = vrot.slane %v603, 4
        %v606 = vshll.u32 %v414, 16
        %v608 = vrot.slane %v606, 5
        %v609 = vsel %vm417, %v604, %v608
        %v610 = vunpack.c.l.b16 %v431
        %v611 = vunpack.c.l.b16 %v441
        %v612 = vunpack.c.l.b16 %v455
        %v613 = vunpack.c.l.b16 %v465
        %v614 = vunpack.c.l.b16 %v479
        %v615 = vunpack.c.l.b16 %v489
        %v616 = vunpack.c.l.b16 %v503
        %v617 = vunpack.c.l.b16 %v513
        %v618 = vunpack.c.l.b16 %v527
        %v619 = vunpack.c.l.b16 %v537
        %v620 = vunpack.c.l.b16 %v551
        %v621 = vunpack.c.l.b16 %v561
        %v622 = vunpack.c.l.b16 %v575
        %v623 = vunpack.c.l.b16 %v585
        %v624 = vunpack.c.l.b16 %v599
        %v625 = vunpack.c.l.b16 %v609
        %v626 = vpack.c.b16 %v611, %v610
        %v627 = vpack.c.b16 %v613, %v612
        %v628 = vpack.c.b16 %v615, %v614
        %v629 = vpack.c.b16 %v617, %v616
        %v630 = vpack.c.b16 %v619, %v618
        %v631 = vpack.c.b16 %v621, %v620
        %v632 = vpack.c.b16 %v623, %v622
        %v633 = vpack.c.b16 %v625, %v624
        %v650 = vunpack.c.l.b16 %v391
        %v651 = vunpack.c.l.b16 %v392
        %v652 = vunpack.c.l.b16 %v394
        %v653 = vunpack.c.l.b16 %v395
        %v654 = vunpack.c.l.b16 %v397
        %v655 = vunpack.c.l.b16 %v398
        %v656 = vunpack.c.l.b16 %v400
        %v657 = vunpack.c.l.b16 %v401
        %v658 = vunpack.c.l.b16 %v403
        %v659 = vunpack.c.l.b16 %v404
        %v660 = vunpack.c.l.b16 %v406
        %v661 = vunpack.c.l.b16 %v407
        %v662 = vunpack.c.l.b16 %v409
        %v663 = vunpack.c.l.b16 %v410
        %v664 = vunpack.c.l.b16 %v412
        %v665 = vunpack.c.l.b16 %v413
        %v666 = vpack.c.b16 %v651, %v650
        %v667 = vpack.c.b16 %v653, %v652
        %v668 = vpack.c.b16 %v655, %v654
        %v669 = vpack.c.b16 %v657, %v656
        %v670 = vpack.c.b16 %v659, %v658
        %v671 = vpack.c.b16 %v661, %v660
        %v672 = vpack.c.b16 %v663, %v662
        %v673 = vpack.c.b16 %v665, %v664
        %674 = vrot.lane.b32.xlu0 %v666, 4
        %v675 = vpop.permute.xlu0 %674
        %676 = vrot.lane.b32.xlu0 %v667, 4
        %v677 = vpop.permute.xlu0 %676
        %678 = vrot.lane.b32.xlu0 %v668, 4
        %v679 = vpop.permute.xlu0 %678
        %680 = vrot.lane.b32.xlu0 %v669, 4
        %v681 = vpop.permute.xlu0 %680
        %682 = vrot.lane.b32.xlu0 %v670, 4
        %v683 = vpop.permute.xlu0 %682
        %684 = vrot.lane.b32.xlu0 %v671, 4
        %v685 = vpop.permute.xlu0 %684
        %686 = vrot.lane.b32.xlu0 %v672, 4
        %v687 = vpop.permute.xlu0 %686
        %688 = vrot.lane.b32.xlu0 %v673, 4
        %v689 = vpop.permute.xlu0 %688
        %690 = vrot.lane.b32.xlu0 %v626, 8
        %v691 = vpop.permute.xlu0 %690
        %692 = vrot.lane.b32.xlu0 %v627, 8
        %v693 = vpop.permute.xlu0 %692
        %694 = vrot.lane.b32.xlu0 %v628, 8
        %v695 = vpop.permute.xlu0 %694
        %696 = vrot.lane.b32.xlu0 %v629, 8
        %v697 = vpop.permute.xlu0 %696
        %698 = vrot.lane.b32.xlu0 %v630, 8
        %v699 = vpop.permute.xlu0 %698
        %700 = vrot.lane.b32.xlu0 %v631, 8
        %v701 = vpop.permute.xlu0 %700
        %702 = vrot.lane.b32.xlu0 %v632, 8
        %v703 = vpop.permute.xlu0 %702
        %704 = vrot.lane.b32.xlu0 %v633, 8
        %v705 = vpop.permute.xlu0 %704
        %706 = vrot.lane.b32.xlu0 %v666, 12
        %v707 = vpop.permute.xlu0 %706
        %708 = vrot.lane.b32.xlu0 %v667, 12
        %v709 = vpop.permute.xlu0 %708
        %710 = vrot.lane.b32.xlu0 %v668, 12
        %v711 = vpop.permute.xlu0 %710
        %712 = vrot.lane.b32.xlu0 %v669, 12
        %v713 = vpop.permute.xlu0 %712
        %714 = vrot.lane.b32.xlu0 %v670, 12
        %v715 = vpop.permute.xlu0 %714
        %716 = vrot.lane.b32.xlu0 %v671, 12
        %v717 = vpop.permute.xlu0 %716
        %718 = vrot.lane.b32.xlu0 %v672, 12
        %v719 = vpop.permute.xlu0 %718
        %720 = vrot.lane.b32.xlu0 %v673, 12
        %v721 = vpop.permute.xlu0 %720
        %v724 = vsel %vm292, %v626, %v675
        %v727 = vsel %vm292, %v627, %v677
        %v730 = vsel %vm292, %v628, %v679
        %v733 = vsel %vm292, %v629, %v681
        %v736 = vsel %vm292, %v630, %v683
        %v739 = vsel %vm292, %v631, %v685
        %v742 = vsel %vm292, %v632, %v687
        %v745 = vsel %vm292, %v633, %v689
        %v747 = vsel %vm317, %v724, %v691
        %v749 = vsel %vm317, %v727, %v693
        %v751 = vsel %vm317, %v730, %v695
        %v753 = vsel %vm317, %v733, %v697
        %v755 = vsel %vm317, %v736, %v699
        %v757 = vsel %vm317, %v739, %v701
        %v759 = vsel %vm317, %v742, %v703
        %v761 = vsel %vm317, %v745, %v705
        %v763 = vsel %vm334, %v747, %v707
        %v765 = vsel %vm334, %v749, %v709
        %v767 = vsel %vm334, %v751, %v711
        %v769 = vsel %vm334, %v753, %v713
        %v771 = vsel %vm334, %v755, %v715
        %v773 = vsel %vm334, %v757, %v717
        %v775 = vsel %vm334, %v759, %v719
        %v777 = vsel %vm334, %v761, %v721
        %s778 = scalar_lea.vmem %s1, 4
        %v779 = vld [vmem:[%s778] sm:$0xf]
        %v781 = vsel %vm357, %v779, 0
        %v783 = vsel %vm357, %v763, 0
        %v785 = vsel %vm357, %v765, 0
        %v787 = vsel %vm357, %v767, 0
        %v789 = vsel %vm357, %v769, 0
        %v791 = vsel %vm357, %v771, 0
        %v793 = vsel %vm357, %v773, 0
        %v795 = vsel %vm357, %v775, 0
        %v797 = vsel %vm357, %v777, 0
        %799 = vmatpush.bf16.xpose.msra.mxu0 %v797
        %800 = vmatpush.bf16.xpose.msra.mxu0 %v795
        %801 = vmatpush.bf16.xpose.msra.mxu0 %v793
        %802 = vmatpush.bf16.xpose.msra.mxu0 %v791
        %803 = vmatpush.bf16.xpose.msra.mxu0 %v789
        %804 = vmatpush.bf16.xpose.msra.mxu0 %v787
        %805 = vmatpush.bf16.xpose.msra.mxu0 %v785
        %806 = vmatpush.bf16.xpose.msra.mxu0 %v783
        %807 = vmatmul.bf16.gmra.mxu0 %v781
        %v808 = vpop.f32.mrf.mxu0
        %v809 = vadd.f32 %v355, %v808
        %v810 = vpop.f32.mrf.mxu0
        %811 = vdwg.mxu0
        %s812 = scalar_lea.vmem %s177, 8 [#allocation2]
        %813 = vst [vmem:[%s812] sm:$0xff] %v809
        %s814 = sadd.s32 %s183, 1
        %s815 = smul.u32 %s814, 3
        %s816 = smul.addr %s815, 4
        %s817 = scalar_lea.vmem %s182, %s816
        %v818 = vld [vmem:[%s817] sm:$0xf]
        %v819 = vld [vmem:[%s817 + $0x4] sm:$0xf]
        %v820 = vld [vmem:[%s817 + $0xc] sm:$0xf]
        %v821 = vld [vmem:[%s817 + $0x10] sm:$0xf]
        %v822 = vld [vmem:[%s817 + $0x18] sm:$0xf]
        %v823 = vld [vmem:[%s817 + $0x1c] sm:$0xf]
        %v824 = vld [vmem:[%s817 + $0x24] sm:$0xf]
        %v825 = vld [vmem:[%s817 + $0x28] sm:$0xf]
        %v826 = vld [vmem:[%s817 + $0x30] sm:$0xf]
        %v827 = vld [vmem:[%s817 + $0x34] sm:$0xf]
        %v828 = vld [vmem:[%s817 + $0x3c] sm:$0xf]
        %v829 = vld [vmem:[%s817 + $0x40] sm:$0xf]
        %v830 = vld [vmem:[%s817 + $0x48] sm:$0xf]
        %v831 = vld [vmem:[%s817 + $0x4c] sm:$0xf]
        %v832 = vld [vmem:[%s817 + $0x54] sm:$0xf]
        %v833 = vld [vmem:[%s817 + $0x58] sm:$0xf]
        %v834 = vld [vmem:[%s187] sm:$0xf]
        %v835 = vld [vmem:[%s187 + $0x4] sm:$0xf]
        %v836 = vld [vmem:[%s187 + $0xc] sm:$0xf]
        %v837 = vld [vmem:[%s187 + $0x10] sm:$0xf]
        %v838 = vld [vmem:[%s187 + $0x18] sm:$0xf]
        %v839 = vld [vmem:[%s187 + $0x1c] sm:$0xf]
        %v840 = vld [vmem:[%s187 + $0x24] sm:$0xf]
        %v841 = vld [vmem:[%s187 + $0x28] sm:$0xf]
        %v842 = vld [vmem:[%s187 + $0x30] sm:$0xf]
        %v843 = vld [vmem:[%s187 + $0x34] sm:$0xf]
        %v844 = vld [vmem:[%s187 + $0x3c] sm:$0xf]
        %v845 = vld [vmem:[%s187 + $0x40] sm:$0xf]
        %v846 = vld [vmem:[%s187 + $0x48] sm:$0xf]
        %v847 = vld [vmem:[%s187 + $0x4c] sm:$0xf]
        %v848 = vld [vmem:[%s187 + $0x54] sm:$0xf]
        %v849 = vld [vmem:[%s187 + $0x58] sm:$0xf]
        %v866 = vunpack.c.l.b16 %v818
        %v867 = vunpack.c.l.b16 %v819
        %v868 = vunpack.c.l.b16 %v820
        %v869 = vunpack.c.l.b16 %v821
        %v870 = vunpack.c.l.b16 %v822
        %v871 = vunpack.c.l.b16 %v823
        %v872 = vunpack.c.l.b16 %v824
        %v873 = vunpack.c.l.b16 %v825
        %v874 = vunpack.c.l.b16 %v826
        %v875 = vunpack.c.l.b16 %v827
        %v876 = vunpack.c.l.b16 %v828
        %v877 = vunpack.c.l.b16 %v829
        %v878 = vunpack.c.l.b16 %v830
        %v879 = vunpack.c.l.b16 %v831
        %v880 = vunpack.c.l.b16 %v832
        %v881 = vunpack.c.l.b16 %v833
        %v882 = vpack.c.b16 %v867, %v866
        %v883 = vpack.c.b16 %v869, %v868
        %v884 = vpack.c.b16 %v871, %v870
        %v885 = vpack.c.b16 %v873, %v872
        %v886 = vpack.c.b16 %v875, %v874
        %v887 = vpack.c.b16 %v877, %v876
        %v888 = vpack.c.b16 %v879, %v878
        %v889 = vpack.c.b16 %v881, %v880
        %890 = vrot.lane.b32.xlu0 %v882, 4
        %v891 = vpop.permute.xlu0 %890
        %892 = vrot.lane.b32.xlu0 %v883, 4
        %v893 = vpop.permute.xlu0 %892
        %894 = vrot.lane.b32.xlu0 %v884, 4
        %v895 = vpop.permute.xlu0 %894
        %896 = vrot.lane.b32.xlu0 %v885, 4
        %v897 = vpop.permute.xlu0 %896
        %898 = vrot.lane.b32.xlu0 %v886, 4
        %v899 = vpop.permute.xlu0 %898
        %900 = vrot.lane.b32.xlu0 %v887, 4
        %v901 = vpop.permute.xlu0 %900
        %902 = vrot.lane.b32.xlu0 %v888, 4
        %v903 = vpop.permute.xlu0 %902
        %904 = vrot.lane.b32.xlu0 %v889, 4
        %v905 = vpop.permute.xlu0 %904
        %v922 = vunpack.c.l.b16 %v834
        %v923 = vunpack.c.l.b16 %v835
        %v924 = vunpack.c.l.b16 %v836
        %v925 = vunpack.c.l.b16 %v837
        %v926 = vunpack.c.l.b16 %v838
        %v927 = vunpack.c.l.b16 %v839
        %v928 = vunpack.c.l.b16 %v840
        %v929 = vunpack.c.l.b16 %v841
        %v930 = vunpack.c.l.b16 %v842
        %v931 = vunpack.c.l.b16 %v843
        %v932 = vunpack.c.l.b16 %v844
        %v933 = vunpack.c.l.b16 %v845
        %v934 = vunpack.c.l.b16 %v846
        %v935 = vunpack.c.l.b16 %v847
        %v936 = vunpack.c.l.b16 %v848
        %v937 = vunpack.c.l.b16 %v849
        %v938 = vpack.c.b16 %v923, %v922
        %v939 = vpack.c.b16 %v925, %v924
        %v940 = vpack.c.b16 %v927, %v926
        %v941 = vpack.c.b16 %v929, %v928
        %v942 = vpack.c.b16 %v931, %v930
        %v943 = vpack.c.b16 %v933, %v932
        %v944 = vpack.c.b16 %v935, %v934
        %v945 = vpack.c.b16 %v937, %v936
        %946 = vrot.lane.b32.xlu0 %v938, 8
        %v947 = vpop.permute.xlu0 %946
        %948 = vrot.lane.b32.xlu0 %v939, 8
        %v949 = vpop.permute.xlu0 %948
        %950 = vrot.lane.b32.xlu0 %v940, 8
        %v951 = vpop.permute.xlu0 %950
        %952 = vrot.lane.b32.xlu0 %v941, 8
        %v953 = vpop.permute.xlu0 %952
        %954 = vrot.lane.b32.xlu0 %v942, 8
        %v955 = vpop.permute.xlu0 %954
        %956 = vrot.lane.b32.xlu0 %v943, 8
        %v957 = vpop.permute.xlu0 %956
        %958 = vrot.lane.b32.xlu0 %v944, 8
        %v959 = vpop.permute.xlu0 %958
        %960 = vrot.lane.b32.xlu0 %v945, 8
        %v961 = vpop.permute.xlu0 %960
        %962 = vrot.lane.b32.xlu0 %v938, 12
        %v963 = vpop.permute.xlu0 %962
        %964 = vrot.lane.b32.xlu0 %v939, 12
        %v965 = vpop.permute.xlu0 %964
        %966 = vrot.lane.b32.xlu0 %v940, 12
        %v967 = vpop.permute.xlu0 %966
        %968 = vrot.lane.b32.xlu0 %v941, 12
        %v969 = vpop.permute.xlu0 %968
        %970 = vrot.lane.b32.xlu0 %v942, 12
        %v971 = vpop.permute.xlu0 %970
        %972 = vrot.lane.b32.xlu0 %v943, 12
        %v973 = vpop.permute.xlu0 %972
        %974 = vrot.lane.b32.xlu0 %v944, 12
        %v975 = vpop.permute.xlu0 %974
        %976 = vrot.lane.b32.xlu0 %v945, 12
        %v977 = vpop.permute.xlu0 %976
        %v980 = vsel %vm292, %v882, %v891
        %v983 = vsel %vm292, %v883, %v893
        %v986 = vsel %vm292, %v884, %v895
        %v989 = vsel %vm292, %v885, %v897
        %v992 = vsel %vm292, %v886, %v899
        %v995 = vsel %vm292, %v887, %v901
        %v998 = vsel %vm292, %v888, %v903
        %v1001 = vsel %vm292, %v889, %v905
        %v1003 = vsel %vm317, %v980, %v947
        %v1005 = vsel %vm317, %v983, %v949
        %v1007 = vsel %vm317, %v986, %v951
        %v1009 = vsel %vm317, %v989, %v953
        %v1011 = vsel %vm317, %v992, %v955
        %v1013 = vsel %vm317, %v995, %v957
        %v1015 = vsel %vm317, %v998, %v959
        %v1017 = vsel %vm317, %v1001, %v961
        %v1019 = vsel %vm334, %v1003, %v963
        %v1021 = vsel %vm334, %v1005, %v965
        %v1023 = vsel %vm334, %v1007, %v967
        %v1025 = vsel %vm334, %v1009, %v969
        %v1027 = vsel %vm334, %v1011, %v971
        %v1029 = vsel %vm334, %v1013, %v973
        %v1031 = vsel %vm334, %v1015, %v975
        %v1033 = vsel %vm334, %v1017, %v977
        %s1034 = scalar_lea.vmem %s1, 8
        %v1035 = vld [vmem:[%s1034] sm:$0xf]
        %v1037 = vsel %vm357, %v1035, 0
        %v1039 = vsel %vm357, %v1019, 0
        %v1041 = vsel %vm357, %v1021, 0
        %v1043 = vsel %vm357, %v1023, 0
        %v1045 = vsel %vm357, %v1025, 0
        %v1047 = vsel %vm357, %v1027, 0
        %v1049 = vsel %vm357, %v1029, 0
        %v1051 = vsel %vm357, %v1031, 0
        %v1053 = vsel %vm357, %v1033, 0
        %1055 = vmatpush.bf16.xpose.msra.mxu0 %v1053
        %1056 = vmatpush.bf16.xpose.msra.mxu0 %v1051
        %1057 = vmatpush.bf16.xpose.msra.mxu0 %v1049
        %1058 = vmatpush.bf16.xpose.msra.mxu0 %v1047
        %1059 = vmatpush.bf16.xpose.msra.mxu0 %v1045
        %1060 = vmatpush.bf16.xpose.msra.mxu0 %v1043
        %1061 = vmatpush.bf16.xpose.msra.mxu0 %v1041
        %1062 = vmatpush.bf16.xpose.msra.mxu0 %v1039
        %1063 = vmatmul.bf16.gmra.mxu0 %v1037
        %v1064 = vpop.f32.mrf.mxu0
        %v1065 = vadd.f32 %v355, %v1064
        %v1066 = vpop.f32.mrf.mxu0
        %1067 = vdwg.mxu0
        %s1068 = scalar_lea.vmem %s177, 16 [#allocation2]
        %1069 = vst [vmem:[%s1068] sm:$0xff] %v1065
        %v1070 = vld [vmem:[%s817] sm:$0xf]
        %v1071 = vld [vmem:[%s817 + $0x4] sm:$0xf]
        %v1072 = vld [vmem:[%s817 + $0x8] sm:$0x1]
        %v1073 = vld [vmem:[%s817 + $0xc] sm:$0xf]
        %v1074 = vld [vmem:[%s817 + $0x10] sm:$0xf]
        %v1075 = vld [vmem:[%s817 + $0x14] sm:$0x1]
        %v1076 = vld [vmem:[%s817 + $0x18] sm:$0xf]
        %v1077 = vld [vmem:[%s817 + $0x1c] sm:$0xf]
        %v1078 = vld [vmem:[%s817 + $0x20] sm:$0x1]
        %v1079 = vld [vmem:[%s817 + $0x24] sm:$0xf]
        %v1080 = vld [vmem:[%s817 + $0x28] sm:$0xf]
        %v1081 = vld [vmem:[%s817 + $0x2c] sm:$0x1]
        %v1082 = vld [vmem:[%s817 + $0x30] sm:$0xf]
        %v1083 = vld [vmem:[%s817 + $0x34] sm:$0xf]
        %v1084 = vld [vmem:[%s817 + $0x38] sm:$0x1]
        %v1085 = vld [vmem:[%s817 + $0x3c] sm:$0xf]
        %v1086 = vld [vmem:[%s817 + $0x40] sm:$0xf]
        %v1087 = vld [vmem:[%s817 + $0x44] sm:$0x1]
        %v1088 = vld [vmem:[%s817 + $0x48] sm:$0xf]
        %v1089 = vld [vmem:[%s817 + $0x4c] sm:$0xf]
        %v1090 = vld [vmem:[%s817 + $0x50] sm:$0x1]
        %v1091 = vld [vmem:[%s817 + $0x54] sm:$0xf]
        %v1092 = vld [vmem:[%s817 + $0x58] sm:$0xf]
        %v1093 = vld [vmem:[%s817 + $0x5c] sm:$0x1]
        %v1095 = vshrl.u32 %v1070, 16
        %v1097 = vrot.slane %v1095, 4
        %v1098 = vshll.u32 %v1070, 16
        %v1100 = vrot.slane %v1098, 5
        %v1101 = vor.u32 %v1097, %v1100
        %v1102 = vrot.slane %v1101, 4
        %v1104 = vshll.u32 %v1071, 16
        %v1106 = vrot.slane %v1104, 5
        %v1107 = vsel %vm417, %v1102, %v1106
        %v1108 = vshrl.u32 %v1071, 16
        %v1110 = vrot.slane %v1108, 4
        %v1111 = vor.u32 %v1110, %v1106
        %v1112 = vrot.slane %v1111, 4
        %v1114 = vshll.u32 %v1072, 16
        %v1116 = vrot.slane %v1114, 5
        %v1117 = vsel %vm417, %v1112, %v1116
        %v1119 = vshrl.u32 %v1073, 16
        %v1121 = vrot.slane %v1119, 4
        %v1122 = vshll.u32 %v1073, 16
        %v1124 = vrot.slane %v1122, 5
        %v1125 = vor.u32 %v1121, %v1124
        %v1126 = vrot.slane %v1125, 4
        %v1128 = vshll.u32 %v1074, 16
        %v1130 = vrot.slane %v1128, 5
        %v1131 = vsel %vm417, %v1126, %v1130
        %v1132 = vshrl.u32 %v1074, 16
        %v1134 = vrot.slane %v1132, 4
        %v1135 = vor.u32 %v1134, %v1130
        %v1136 = vrot.slane %v1135, 4
        %v1138 = vshll.u32 %v1075, 16
        %v1140 = vrot.slane %v1138, 5
        %v1141 = vsel %vm417, %v1136, %v1140
        %v1143 = vshrl.u32 %v1076, 16
        %v1145 = vrot.slane %v1143, 4
        %v1146 = vshll.u32 %v1076, 16
        %v1148 = vrot.slane %v1146, 5
        %v1149 = vor.u32 %v1145, %v1148
        %v1150 = vrot.slane %v1149, 4
        %v1152 = vshll.u32 %v1077, 16
        %v1154 = vrot.slane %v1152, 5
        %v1155 = vsel %vm417, %v1150, %v1154
        %v1156 = vshrl.u32 %v1077, 16
        %v1158 = vrot.slane %v1156, 4
        %v1159 = vor.u32 %v1158, %v1154
        %v1160 = vrot.slane %v1159, 4
        %v1162 = vshll.u32 %v1078, 16
        %v1164 = vrot.slane %v1162, 5
        %v1165 = vsel %vm417, %v1160, %v1164
        %v1167 = vshrl.u32 %v1079, 16
        %v1169 = vrot.slane %v1167, 4
        %v1170 = vshll.u32 %v1079, 16
        %v1172 = vrot.slane %v1170, 5
        %v1173 = vor.u32 %v1169, %v1172
        %v1174 = vrot.slane %v1173, 4
        %v1176 = vshll.u32 %v1080, 16
        %v1178 = vrot.slane %v1176, 5
        %v1179 = vsel %vm417, %v1174, %v1178
        %v1180 = vshrl.u32 %v1080, 16
        %v1182 = vrot.slane %v1180, 4
        %v1183 = vor.u32 %v1182, %v1178
        %v1184 = vrot.slane %v1183, 4
        %v1186 = vshll.u32 %v1081, 16
        %v1188 = vrot.slane %v1186, 5
        %v1189 = vsel %vm417, %v1184, %v1188
        %v1191 = vshrl.u32 %v1082, 16
        %v1193 = vrot.slane %v1191, 4
        %v1194 = vshll.u32 %v1082, 16
        %v1196 = vrot.slane %v1194, 5
        %v1197 = vor.u32 %v1193, %v1196
        %v1198 = vrot.slane %v1197, 4
        %v1200 = vshll.u32 %v1083, 16
        %v1202 = vrot.slane %v1200, 5
        %v1203 = vsel %vm417, %v1198, %v1202
        %v1204 = vshrl.u32 %v1083, 16
        %v1206 = vrot.slane %v1204, 4
        %v1207 = vor.u32 %v1206, %v1202
        %v1208 = vrot.slane %v1207, 4
        %v1210 = vshll.u32 %v1084, 16
        %v1212 = vrot.slane %v1210, 5
        %v1213 = vsel %vm417, %v1208, %v1212
        %v1215 = vshrl.u32 %v1085, 16
        %v1217 = vrot.slane %v1215, 4
        %v1218 = vshll.u32 %v1085, 16
        %v1220 = vrot.slane %v1218, 5
        %v1221 = vor.u32 %v1217, %v1220
        %v1222 = vrot.slane %v1221, 4
        %v1224 = vshll.u32 %v1086, 16
        %v1226 = vrot.slane %v1224, 5
        %v1227 = vsel %vm417, %v1222, %v1226
        %v1228 = vshrl.u32 %v1086, 16
        %v1230 = vrot.slane %v1228, 4
        %v1231 = vor.u32 %v1230, %v1226
        %v1232 = vrot.slane %v1231, 4
        %v1234 = vshll.u32 %v1087, 16
        %v1236 = vrot.slane %v1234, 5
        %v1237 = vsel %vm417, %v1232, %v1236
        %v1239 = vshrl.u32 %v1088, 16
        %v1241 = vrot.slane %v1239, 4
        %v1242 = vshll.u32 %v1088, 16
        %v1244 = vrot.slane %v1242, 5
        %v1245 = vor.u32 %v1241, %v1244
        %v1246 = vrot.slane %v1245, 4
        %v1248 = vshll.u32 %v1089, 16
        %v1250 = vrot.slane %v1248, 5
        %v1251 = vsel %vm417, %v1246, %v1250
        %v1252 = vshrl.u32 %v1089, 16
        %v1254 = vrot.slane %v1252, 4
        %v1255 = vor.u32 %v1254, %v1250
        %v1256 = vrot.slane %v1255, 4
        %v1258 = vshll.u32 %v1090, 16
        %v1260 = vrot.slane %v1258, 5
        %v1261 = vsel %vm417, %v1256, %v1260
        %v1263 = vshrl.u32 %v1091, 16
        %v1265 = vrot.slane %v1263, 4
        %v1266 = vshll.u32 %v1091, 16
        %v1268 = vrot.slane %v1266, 5
        %v1269 = vor.u32 %v1265, %v1268
        %v1270 = vrot.slane %v1269, 4
        %v1272 = vshll.u32 %v1092, 16
        %v1274 = vrot.slane %v1272, 5
        %v1275 = vsel %vm417, %v1270, %v1274
        %v1276 = vshrl.u32 %v1092, 16
        %v1278 = vrot.slane %v1276, 4
        %v1279 = vor.u32 %v1278, %v1274
        %v1280 = vrot.slane %v1279, 4
        %v1282 = vshll.u32 %v1093, 16
        %v1284 = vrot.slane %v1282, 5
        %v1285 = vsel %vm417, %v1280, %v1284
        %v1286 = vld [vmem:[%s187] sm:$0xf]
        %v1287 = vld [vmem:[%s187 + $0x4] sm:$0xf]
        %v1288 = vld [vmem:[%s187 + $0x8] sm:$0x1]
        %v1289 = vld [vmem:[%s187 + $0xc] sm:$0xf]
        %v1290 = vld [vmem:[%s187 + $0x10] sm:$0xf]
        %v1291 = vld [vmem:[%s187 + $0x14] sm:$0x1]
        %v1292 = vld [vmem:[%s187 + $0x18] sm:$0xf]
        %v1293 = vld [vmem:[%s187 + $0x1c] sm:$0xf]
        %v1294 = vld [vmem:[%s187 + $0x20] sm:$0x1]
        %v1295 = vld [vmem:[%s187 + $0x24] sm:$0xf]
        %v1296 = vld [vmem:[%s187 + $0x28] sm:$0xf]
        %v1297 = vld [vmem:[%s187 + $0x2c] sm:$0x1]
        %v1298 = vld [vmem:[%s187 + $0x30] sm:$0xf]
        %v1299 = vld [vmem:[%s187 + $0x34] sm:$0xf]
        %v1300 = vld [vmem:[%s187 + $0x38] sm:$0x1]
        %v1301 = vld [vmem:[%s187 + $0x3c] sm:$0xf]
        %v1302 = vld [vmem:[%s187 + $0x40] sm:$0xf]
        %v1303 = vld [vmem:[%s187 + $0x44] sm:$0x1]
        %v1304 = vld [vmem:[%s187 + $0x48] sm:$0xf]
        %v1305 = vld [vmem:[%s187 + $0x4c] sm:$0xf]
        %v1306 = vld [vmem:[%s187 + $0x50] sm:$0x1]
        %v1307 = vld [vmem:[%s187 + $0x54] sm:$0xf]
        %v1308 = vld [vmem:[%s187 + $0x58] sm:$0xf]
        %v1309 = vld [vmem:[%s187 + $0x5c] sm:$0x1]
        %v1311 = vshrl.u32 %v1286, 16
        %v1313 = vrot.slane %v1311, 4
        %v1314 = vshll.u32 %v1286, 16
        %v1316 = vrot.slane %v1314, 5
        %v1317 = vor.u32 %v1313, %v1316
        %v1318 = vrot.slane %v1317, 4
        %v1320 = vshll.u32 %v1287, 16
        %v1322 = vrot.slane %v1320, 5
        %v1323 = vsel %vm417, %v1318, %v1322
        %v1324 = vshrl.u32 %v1287, 16
        %v1326 = vrot.slane %v1324, 4
        %v1327 = vor.u32 %v1326, %v1322
        %v1328 = vrot.slane %v1327, 4
        %v1330 = vshll.u32 %v1288, 16
        %v1332 = vrot.slane %v1330, 5
        %v1333 = vsel %vm417, %v1328, %v1332
        %v1335 = vshrl.u32 %v1289, 16
        %v1337 = vrot.slane %v1335, 4
        %v1338 = vshll.u32 %v1289, 16
        %v1340 = vrot.slane %v1338, 5
        %v1341 = vor.u32 %v1337, %v1340
        %v1342 = vrot.slane %v1341, 4
        %v1344 = vshll.u32 %v1290, 16
        %v1346 = vrot.slane %v1344, 5
        %v1347 = vsel %vm417, %v1342, %v1346
        %v1348 = vshrl.u32 %v1290, 16
        %v1350 = vrot.slane %v1348, 4
        %v1351 = vor.u32 %v1350, %v1346
        %v1352 = vrot.slane %v1351, 4
        %v1354 = vshll.u32 %v1291, 16
        %v1356 = vrot.slane %v1354, 5
        %v1357 = vsel %vm417, %v1352, %v1356
        %v1359 = vshrl.u32 %v1292, 16
        %v1361 = vrot.slane %v1359, 4
        %v1362 = vshll.u32 %v1292, 16
        %v1364 = vrot.slane %v1362, 5
        %v1365 = vor.u32 %v1361, %v1364
        %v1366 = vrot.slane %v1365, 4
        %v1368 = vshll.u32 %v1293, 16
        %v1370 = vrot.slane %v1368, 5
        %v1371 = vsel %vm417, %v1366, %v1370
        %v1372 = vshrl.u32 %v1293, 16
        %v1374 = vrot.slane %v1372, 4
        %v1375 = vor.u32 %v1374, %v1370
        %v1376 = vrot.slane %v1375, 4
        %v1378 = vshll.u32 %v1294, 16
        %v1380 = vrot.slane %v1378, 5
        %v1381 = vsel %vm417, %v1376, %v1380
        %v1383 = vshrl.u32 %v1295, 16
        %v1385 = vrot.slane %v1383, 4
        %v1386 = vshll.u32 %v1295, 16
        %v1388 = vrot.slane %v1386, 5
        %v1389 = vor.u32 %v1385, %v1388
        %v1390 = vrot.slane %v1389, 4
        %v1392 = vshll.u32 %v1296, 16
        %v1394 = vrot.slane %v1392, 5
        %v1395 = vsel %vm417, %v1390, %v1394
        %v1396 = vshrl.u32 %v1296, 16
        %v1398 = vrot.slane %v1396, 4
        %v1399 = vor.u32 %v1398, %v1394
        %v1400 = vrot.slane %v1399, 4
        %v1402 = vshll.u32 %v1297, 16
        %v1404 = vrot.slane %v1402, 5
        %v1405 = vsel %vm417, %v1400, %v1404
        %v1407 = vshrl.u32 %v1298, 16
        %v1409 = vrot.slane %v1407, 4
        %v1410 = vshll.u32 %v1298, 16
        %v1412 = vrot.slane %v1410, 5
        %v1413 = vor.u32 %v1409, %v1412
        %v1414 = vrot.slane %v1413, 4
        %v1416 = vshll.u32 %v1299, 16
        %v1418 = vrot.slane %v1416, 5
        %v1419 = vsel %vm417, %v1414, %v1418
        %v1420 = vshrl.u32 %v1299, 16
        %v1422 = vrot.slane %v1420, 4
        %v1423 = vor.u32 %v1422, %v1418
        %v1424 = vrot.slane %v1423, 4
        %v1426 = vshll.u32 %v1300, 16
        %v1428 = vrot.slane %v1426, 5
        %v1429 = vsel %vm417, %v1424, %v1428
        %v1431 = vshrl.u32 %v1301, 16
        %v1433 = vrot.slane %v1431, 4
        %v1434 = vshll.u32 %v1301, 16
        %v1436 = vrot.slane %v1434, 5
        %v1437 = vor.u32 %v1433, %v1436
        %v1438 = vrot.slane %v1437, 4
        %v1440 = vshll.u32 %v1302, 16
        %v1442 = vrot.slane %v1440, 5
        %v1443 = vsel %vm417, %v1438, %v1442
        %v1444 = vshrl.u32 %v1302, 16
        %v1446 = vrot.slane %v1444, 4
        %v1447 = vor.u32 %v1446, %v1442
        %v1448 = vrot.slane %v1447, 4
        %v1450 = vshll.u32 %v1303, 16
        %v1452 = vrot.slane %v1450, 5
        %v1453 = vsel %vm417, %v1448, %v1452
        %v1455 = vshrl.u32 %v1304, 16
        %v1457 = vrot.slane %v1455, 4
        %v1458 = vshll.u32 %v1304, 16
        %v1460 = vrot.slane %v1458, 5
        %v1461 = vor.u32 %v1457, %v1460
        %v1462 = vrot.slane %v1461, 4
        %v1464 = vshll.u32 %v1305, 16
        %v1466 = vrot.slane %v1464, 5
        %v1467 = vsel %vm417, %v1462, %v1466
        %v1468 = vshrl.u32 %v1305, 16
        %v1470 = vrot.slane %v1468, 4
        %v1471 = vor.u32 %v1470, %v1466
        %v1472 = vrot.slane %v1471, 4
        %v1474 = vshll.u32 %v1306, 16
        %v1476 = vrot.slane %v1474, 5
        %v1477 = vsel %vm417, %v1472, %v1476
        %v1479 = vshrl.u32 %v1307, 16
        %v1481 = vrot.slane %v1479, 4
        %v1482 = vshll.u32 %v1307, 16
        %v1484 = vrot.slane %v1482, 5
        %v1485 = vor.u32 %v1481, %v1484
        %v1486 = vrot.slane %v1485, 4
        %v1488 = vshll.u32 %v1308, 16
        %v1490 = vrot.slane %v1488, 5
        %v1491 = vsel %vm417, %v1486, %v1490
        %v1492 = vshrl.u32 %v1308, 16
        %v1494 = vrot.slane %v1492, 4
        %v1495 = vor.u32 %v1494, %v1490
        %v1496 = vrot.slane %v1495, 4
        %v1498 = vshll.u32 %v1309, 16
        %v1500 = vrot.slane %v1498, 5
        %v1501 = vsel %vm417, %v1496, %v1500
        %v1502 = vunpack.c.l.b16 %v1107
        %v1503 = vunpack.c.l.b16 %v1117
        %v1504 = vunpack.c.l.b16 %v1131
        %v1505 = vunpack.c.l.b16 %v1141
        %v1506 = vunpack.c.l.b16 %v1155
        %v1507 = vunpack.c.l.b16 %v1165
        %v1508 = vunpack.c.l.b16 %v1179
        %v1509 = vunpack.c.l.b16 %v1189
        %v1510 = vunpack.c.l.b16 %v1203
        %v1511 = vunpack.c.l.b16 %v1213
        %v1512 = vunpack.c.l.b16 %v1227
        %v1513 = vunpack.c.l.b16 %v1237
        %v1514 = vunpack.c.l.b16 %v1251
        %v1515 = vunpack.c.l.b16 %v1261
        %v1516 = vunpack.c.l.b16 %v1275
        %v1517 = vunpack.c.l.b16 %v1285
        %v1518 = vpack.c.b16 %v1503, %v1502
        %v1519 = vpack.c.b16 %v1505, %v1504
        %v1520 = vpack.c.b16 %v1507, %v1506
        %v1521 = vpack.c.b16 %v1509, %v1508
        %v1522 = vpack.c.b16 %v1511, %v1510
        %v1523 = vpack.c.b16 %v1513, %v1512
        %v1524 = vpack.c.b16 %v1515, %v1514
        %v1525 = vpack.c.b16 %v1517, %v1516
        %v1542 = vunpack.c.l.b16 %v1070
        %v1543 = vunpack.c.l.b16 %v1071
        %v1544 = vunpack.c.l.b16 %v1073
        %v1545 = vunpack.c.l.b16 %v1074
        %v1546 = vunpack.c.l.b16 %v1076
        %v1547 = vunpack.c.l.b16 %v1077
        %v1548 = vunpack.c.l.b16 %v1079
        %v1549 = vunpack.c.l.b16 %v1080
        %v1550 = vunpack.c.l.b16 %v1082
        %v1551 = vunpack.c.l.b16 %v1083
        %v1552 = vunpack.c.l.b16 %v1085
        %v1553 = vunpack.c.l.b16 %v1086
        %v1554 = vunpack.c.l.b16 %v1088
        %v1555 = vunpack.c.l.b16 %v1089
        %v1556 = vunpack.c.l.b16 %v1091
        %v1557 = vunpack.c.l.b16 %v1092
        %v1558 = vpack.c.b16 %v1543, %v1542
        %v1559 = vpack.c.b16 %v1545, %v1544
        %v1560 = vpack.c.b16 %v1547, %v1546
        %v1561 = vpack.c.b16 %v1549, %v1548
        %v1562 = vpack.c.b16 %v1551, %v1550
        %v1563 = vpack.c.b16 %v1553, %v1552
        %v1564 = vpack.c.b16 %v1555, %v1554
        %v1565 = vpack.c.b16 %v1557, %v1556
        %1566 = vrot.lane.b32.xlu0 %v1558, 4
        %v1567 = vpop.permute.xlu0 %1566
        %1568 = vrot.lane.b32.xlu0 %v1559, 4
        %v1569 = vpop.permute.xlu0 %1568
        %1570 = vrot.lane.b32.xlu0 %v1560, 4
        %v1571 = vpop.permute.xlu0 %1570
        %1572 = vrot.lane.b32.xlu0 %v1561, 4
        %v1573 = vpop.permute.xlu0 %1572
        %1574 = vrot.lane.b32.xlu0 %v1562, 4
        %v1575 = vpop.permute.xlu0 %1574
        %1576 = vrot.lane.b32.xlu0 %v1563, 4
        %v1577 = vpop.permute.xlu0 %1576
        %1578 = vrot.lane.b32.xlu0 %v1564, 4
        %v1579 = vpop.permute.xlu0 %1578
        %1580 = vrot.lane.b32.xlu0 %v1565, 4
        %v1581 = vpop.permute.xlu0 %1580
        %v1582 = vunpack.c.l.b16 %v1323
        %v1583 = vunpack.c.l.b16 %v1333
        %v1584 = vunpack.c.l.b16 %v1347
        %v1585 = vunpack.c.l.b16 %v1357
        %v1586 = vunpack.c.l.b16 %v1371
        %v1587 = vunpack.c.l.b16 %v1381
        %v1588 = vunpack.c.l.b16 %v1395
        %v1589 = vunpack.c.l.b16 %v1405
        %v1590 = vunpack.c.l.b16 %v1419
        %v1591 = vunpack.c.l.b16 %v1429
        %v1592 = vunpack.c.l.b16 %v1443
        %v1593 = vunpack.c.l.b16 %v1453
        %v1594 = vunpack.c.l.b16 %v1467
        %v1595 = vunpack.c.l.b16 %v1477
        %v1596 = vunpack.c.l.b16 %v1491
        %v1597 = vunpack.c.l.b16 %v1501
        %v1598 = vpack.c.b16 %v1583, %v1582
        %v1599 = vpack.c.b16 %v1585, %v1584
        %v1600 = vpack.c.b16 %v1587, %v1586
        %v1601 = vpack.c.b16 %v1589, %v1588
        %v1602 = vpack.c.b16 %v1591, %v1590
        %v1603 = vpack.c.b16 %v1593, %v1592
        %v1604 = vpack.c.b16 %v1595, %v1594
        %v1605 = vpack.c.b16 %v1597, %v1596
        %1606 = vrot.lane.b32.xlu0 %v1598, 8
        %v1607 = vpop.permute.xlu0 %1606
        %1608 = vrot.lane.b32.xlu0 %v1599, 8
        %v1609 = vpop.permute.xlu0 %1608
        %1610 = vrot.lane.b32.xlu0 %v1600, 8
        %v1611 = vpop.permute.xlu0 %1610
        %1612 = vrot.lane.b32.xlu0 %v1601, 8
        %v1613 = vpop.permute.xlu0 %1612
        %1614 = vrot.lane.b32.xlu0 %v1602, 8
        %v1615 = vpop.permute.xlu0 %1614
        %1616 = vrot.lane.b32.xlu0 %v1603, 8
        %v1617 = vpop.permute.xlu0 %1616
        %1618 = vrot.lane.b32.xlu0 %v1604, 8
        %v1619 = vpop.permute.xlu0 %1618
        %1620 = vrot.lane.b32.xlu0 %v1605, 8
        %v1621 = vpop.permute.xlu0 %1620
        %v1638 = vunpack.c.l.b16 %v1286
        %v1639 = vunpack.c.l.b16 %v1287
        %v1640 = vunpack.c.l.b16 %v1289
        %v1641 = vunpack.c.l.b16 %v1290
        %v1642 = vunpack.c.l.b16 %v1292
        %v1643 = vunpack.c.l.b16 %v1293
        %v1644 = vunpack.c.l.b16 %v1295
        %v1645 = vunpack.c.l.b16 %v1296
        %v1646 = vunpack.c.l.b16 %v1298
        %v1647 = vunpack.c.l.b16 %v1299
        %v1648 = vunpack.c.l.b16 %v1301
        %v1649 = vunpack.c.l.b16 %v1302
        %v1650 = vunpack.c.l.b16 %v1304
        %v1651 = vunpack.c.l.b16 %v1305
        %v1652 = vunpack.c.l.b16 %v1307
        %v1653 = vunpack.c.l.b16 %v1308
        %v1654 = vpack.c.b16 %v1639, %v1638
        %v1655 = vpack.c.b16 %v1641, %v1640
        %v1656 = vpack.c.b16 %v1643, %v1642
        %v1657 = vpack.c.b16 %v1645, %v1644
        %v1658 = vpack.c.b16 %v1647, %v1646
        %v1659 = vpack.c.b16 %v1649, %v1648
        %v1660 = vpack.c.b16 %v1651, %v1650
        %v1661 = vpack.c.b16 %v1653, %v1652
        %1662 = vrot.lane.b32.xlu0 %v1654, 12
        %v1663 = vpop.permute.xlu0 %1662
        %1664 = vrot.lane.b32.xlu0 %v1655, 12
        %v1665 = vpop.permute.xlu0 %1664
        %1666 = vrot.lane.b32.xlu0 %v1656, 12
        %v1667 = vpop.permute.xlu0 %1666
        %1668 = vrot.lane.b32.xlu0 %v1657, 12
        %v1669 = vpop.permute.xlu0 %1668
        %1670 = vrot.lane.b32.xlu0 %v1658, 12
        %v1671 = vpop.permute.xlu0 %1670
        %1672 = vrot.lane.b32.xlu0 %v1659, 12
        %v1673 = vpop.permute.xlu0 %1672
        %1674 = vrot.lane.b32.xlu0 %v1660, 12
        %v1675 = vpop.permute.xlu0 %1674
        %1676 = vrot.lane.b32.xlu0 %v1661, 12
        %v1677 = vpop.permute.xlu0 %1676
        %v1680 = vsel %vm292, %v1518, %v1567
        %v1683 = vsel %vm292, %v1519, %v1569
        %v1686 = vsel %vm292, %v1520, %v1571
        %v1689 = vsel %vm292, %v1521, %v1573
        %v1692 = vsel %vm292, %v1522, %v1575
        %v1695 = vsel %vm292, %v1523, %v1577
        %v1698 = vsel %vm292, %v1524, %v1579
        %v1701 = vsel %vm292, %v1525, %v1581
        %v1703 = vsel %vm317, %v1680, %v1607
        %v1705 = vsel %vm317, %v1683, %v1609
        %v1707 = vsel %vm317, %v1686, %v1611
        %v1709 = vsel %vm317, %v1689, %v1613
        %v1711 = vsel %vm317, %v1692, %v1615
        %v1713 = vsel %vm317, %v1695, %v1617
        %v1715 = vsel %vm317, %v1698, %v1619
        %v1717 = vsel %vm317, %v1701, %v1621
        %v1719 = vsel %vm334, %v1703, %v1663
        %v1721 = vsel %vm334, %v1705, %v1665
        %v1723 = vsel %vm334, %v1707, %v1667
        %v1725 = vsel %vm334, %v1709, %v1669
        %v1727 = vsel %vm334, %v1711, %v1671
        %v1729 = vsel %vm334, %v1713, %v1673
        %v1731 = vsel %vm334, %v1715, %v1675
        %v1733 = vsel %vm334, %v1717, %v1677
        %s1734 = scalar_lea.vmem %s1, 12
        %v1735 = vld [vmem:[%s1734] sm:$0xf]
        %v1737 = vsel %vm357, %v1735, 0
        %v1739 = vsel %vm357, %v1719, 0
        %v1741 = vsel %vm357, %v1721, 0
        %v1743 = vsel %vm357, %v1723, 0
        %v1745 = vsel %vm357, %v1725, 0
        %v1747 = vsel %vm357, %v1727, 0
        %v1749 = vsel %vm357, %v1729, 0
        %v1751 = vsel %vm357, %v1731, 0
        %v1753 = vsel %vm357, %v1733, 0
        %1755 = vmatpush.bf16.xpose.msra.mxu0 %v1753
        %1756 = vmatpush.bf16.xpose.msra.mxu0 %v1751
        %1757 = vmatpush.bf16.xpose.msra.mxu0 %v1749
        %1758 = vmatpush.bf16.xpose.msra.mxu0 %v1747
        %1759 = vmatpush.bf16.xpose.msra.mxu0 %v1745
        %1760 = vmatpush.bf16.xpose.msra.mxu0 %v1743
        %1761 = vmatpush.bf16.xpose.msra.mxu0 %v1741
        %1762 = vmatpush.bf16.xpose.msra.mxu0 %v1739
        %1763 = vmatmul.bf16.gmra.mxu0 %v1737
        %v1764 = vpop.f32.mrf.mxu0
        %v1765 = vadd.f32 %v355, %v1764
        %v1766 = vpop.f32.mrf.mxu0
        %1767 = vdwg.mxu0
        %s1768 = scalar_lea.vmem %s177, 24 [#allocation2]
        %1769 = vst [vmem:[%s1768] sm:$0xff] %v1765
        %s1770 = sand.u32 %s107, 1
        %s1771 = scalar_lea.sflag [#allocation3], %s1770
        %s1772 = sand.u32 %s107, 1
        %s1773 = smul.addr %s1772, 32
        %s1774 = scalar_lea.vmem [#allocation2], %s1773
        // Predicated region
        $region33: #{tpu_custom_call.1} parent=31 // pred_check
          %p1775 = pneg %p117
        $region34: #{tpu_custom_call.1} parent=31 // pred_check_branch
          %1777 = sbr.rel (%p1775) target = $region36
        $region35: #{tpu_custom_call.1} parent=31 // pred_region
          %1779 = vsyncadd %s1771, 0
          %s1780 = smul.addr %s21, 8
          %s1781 = sadd.s32 %s22, %s1780
          %s1782 = smul.addr %s1781, 8
          %s1783 = scalar_lea.hbm %s3, %s1782
          %s1784 = sshll.u32 %s1774, 4
          %s1785 = int_to_ptr.vmem [resolvable:$true] %s1784
          %s1786 = sshll.u32 %s1783, 4
          %s1787 = int_to_ptr.hbm [resolvable:$true] %s1786
          %1792 = dma.vmem_to_hbm [thread:$0]  %s1785, 512, %s1787, %s1771, 128, 256, 8
        $region36: #{tpu_custom_call.1} parent=31 // pred_fallthru
          _
      $region32: #{tpu_custom_call.1} parent=5 // pred_fallthru
        _
      %p1793 = scmp.le.s32.totalorder 2, %s12
      // Predicated region
      $region37: #{tpu_custom_call.1} parent=5 // pred_check
        %p1794 = pneg %p1793
      $region38: #{tpu_custom_call.1} parent=5 // pred_check_branch
        %1796 = sbr.rel (%p1794) target = $region40
      $region39: #{tpu_custom_call.1} parent=5 // pred_region
        %s1797 = ssub.s32 %s12, 2
        // Predicated region
        $region41: #{tpu_custom_call.1} parent=39 // pred_check
          %p1798 = pneg %p123
        $region42: #{tpu_custom_call.1} parent=39 // pred_check_branch
          %1800 = sbr.rel (%p1798) target = $region44
        $region43: #{tpu_custom_call.1} parent=39 // pred_region
          %s1801 = sand.u32 %s108, 1
          %s1802 = scalar_lea.sflag [#allocation3], %s1801
          %s1803 = sand.u32 %s108, 1
          %s1804 = smul.addr %s1803, 32
          %s1805 = scalar_lea.vmem [#allocation2], %s1804
          %1807 = dma.done %s1802, 512
        $region44: #{tpu_custom_call.1} parent=39 // pred_fallthru
          _
      $region40: #{tpu_custom_call.1} parent=5 // pred_fallthru
        _
    $region6: #{tpu_custom_call.1} parent=1 // loop_footer
      %s16 = sadd.s32 1, %s12
    $region7: #{tpu_custom_call.1} parent=1 // loop_footer_branch
      %11 = sbr.rel target = $region3
    $region8: #{tpu_custom_call.1} parent=1 // loop_exit
      _
    %1808 = vsyncpa [#allocation3], 1
    %s1809 = scalar_lea.sflag [#allocation3], 1
    %1810 = vsyncpa %s1809, 1

</llo_original>
